<compile_context>
chip_gen: v6e
topology: v6e:2x2x1
jax: 0.10.0
libtpu: 0.0.40
codegen_flags: <defaults>
</compile_context>

<pallas_src>
import jax
import jax.numpy as jnp
import numpy as np
from jax import lax
from jax.experimental import pallas as pl
from jax.experimental.pallas import tpu as pltpu


# MXU operand dtype policy (perf review: bf16 operands + f32 accumulation once
# the contraction dimension is production sized).
_BF16_MIN_CONTRACTION = 256


def _mxu_dtype_for(contraction_dim):
    return jnp.bfloat16 if contraction_dim >= _BF16_MIN_CONTRACTION else None


# ----------------------------------------------------------------------------
# Kernel 1: bottleneck 1x1 conv (per-pixel linear) fused with the
# flatten(2).permute(2,0,1) of both feat and pos_embed.
# ----------------------------------------------------------------------------
def _make_adjust_kernel(B, mxu_dtype):
    def kernel(x_ref, w_ref, b_ref, pos_ref, feat_ref, pos_out_ref):
        # x_ref:       (B, Cin, HW)   native-NCHW derived, lane-dense loads (HW lanes)
        # w_ref:       (Cout, Cin)
        # b_ref:       (1, B*Cout)    bias pre-tiled per batch in the wrapper
        # pos_ref:     (B, Cp, HW)
        # feat_ref:    (HW, B*Cout)   lane-dense, written with ONE full-block store
        # pos_out_ref: (HW, B*Cp)     lane-dense, written with ONE full-block store
        w = w_ref[...]
        if mxu_dtype is not None:
            w = w.astype(mxu_dtype)

        yts = []
        for bb in range(B):                                    # B tiny & static -> unrolled
            xb = x_ref[bb]                                     # (Cin, HW)
            if mxu_dtype is not None:
                xb = xb.astype(mxu_dtype)
            # canonical (M,K)x(K,N) MXU matmul -> (Cout, HW); no transposed-lhs dg.
            yts.append(lax.dot_general(w, xb,
                                       (((1,), (0,)), ((), ())),
                                       preferred_element_type=jnp.float32))
        # sublane-aligned concat (Cout % 8 == 0), one 2D transpose, ONE store,
        # bias added exactly once (broadcast hoisted out of the loop).
        y_t = jnp.concatenate(yts, axis=0) if B > 1 else yts[0]   # (B*Cout, HW)
        feat_ref[...] = jnp.transpose(y_t) + b_ref[...]           # (HW, B*Cout)

        # pos_embed flatten+permute piggy-backs on the already-paid pallas_call.
        p_t = (jnp.concatenate([pos_ref[bb] for bb in range(B)], axis=0)
               if B > 1 else pos_ref[0])                           # (B*Cp, HW)
        pos_out_ref[...] = jnp.transpose(p_t)                      # (HW, B*Cp)

    return kernel


def adjust(src_feat, pos_embed, mask, bottleneck_w, bottleneck_b):
    """Pallas version of EXOTST1.adjust (bottleneck conv + flatten/permute)."""
    B, Cin, H, W = src_feat.shape
    Cout = bottleneck_w.shape[0]
    Cp = pos_embed.shape[1]
    HW = H * W

    x_flat = src_feat.reshape(B, Cin, HW)        # free reshape of NCHW (no transpose)
    pos_flat = pos_embed.reshape(B, Cp, HW)      # free reshape
    bias_tiled = jnp.tile(bottleneck_b.reshape(1, Cout).astype(jnp.float32), (1, B))

    kernel = _make_adjust_kernel(B, _mxu_dtype_for(Cin))
    feat2d, pos2d = pl.pallas_call(
        kernel,
        out_shape=(jax.ShapeDtypeStruct((HW, B * Cout), jnp.float32),
                   jax.ShapeDtypeStruct((HW, B * Cp), jnp.float32)),
        grid=(1,),
        in_specs=[
            pl.BlockSpec((B, Cin, HW), lambda i: (0, 0, 0)),
            pl.BlockSpec((Cout, Cin), lambda i: (0, 0)),
            pl.BlockSpec((1, B * Cout), lambda i: (0, 0)),
            pl.BlockSpec((B, Cp, HW), lambda i: (0, 0, 0)),
        ],
        out_specs=(pl.BlockSpec((HW, B * Cout), lambda i: (0, 0)),
                   pl.BlockSpec((HW, B * Cp), lambda i: (0, 0))),
        compiler_params=pltpu.CompilerParams(dimension_semantics=("arbitrary",)),
    )(x_flat, bottleneck_w, bias_tiled, pos_flat)

    feat_vec = feat2d.reshape(HW, B, Cout)       # free row-major reshape
    pos_vec = pos2d.reshape(HW, B, Cp)           # free row-major reshape
    mask_vec = mask.reshape(mask.shape[0], -1)   # (B, HW), stays bool
    return {"feat": feat_vec, "mask": mask_vec, "pos": pos_vec}


# ----------------------------------------------------------------------------
# Kernel 2: CORNER-head feature fusion (att + broadcast multiply), single step.
# ----------------------------------------------------------------------------
def _make_corner_kernel(B, C, mxu_dtype):
    def kernel(mem_ref, hs_ref, o_ref):
        # mem_ref: (HW_s, B*C)       lane-dense search-region slice of encoder memory
        # hs_ref:  (B, Nq, C)        decoder output embeddings
        # o_ref:   (B, Nq, C, HW_s)  written with ONE full-block store
        m = mem_ref[...]                                       # one lane-dense load
        opts = []
        for bb in range(B):                                    # B tiny & static -> unrolled
            enc = m[:, bb * C:(bb + 1) * C]                    # (HW, C) static lane slice
            enc_t = jnp.transpose(enc)                         # (C, HW)  2D vxpose
            dec = hs_ref[bb]                                   # (Nq, C)
            lhs = dec if mxu_dtype is None else dec.astype(mxu_dtype)
            rhs = enc_t if mxu_dtype is None else enc_t.astype(mxu_dtype)
            # att_t[q, h] = sum_c dec[q, c] * enc[h, c]; canonical matmul with the
            # already-needed enc_t, so no transposed-operand dot_general forms.
            att_t = lax.dot_general(lhs, rhs,
                                    (((1,), (0,)), ((), ())),
                                    preferred_element_type=jnp.float32)   # (Nq, HW)
            opts.append(att_t[:, None, :] * enc_t[None, :, :])            # (Nq, C, HW)
        o_ref[...] = (jnp.stack(opts, axis=0) if B > 1 else opts[0][None])

    return kernel


def corner_fusion(hs, memory, feat_sz):
    """hs: (1, B, Nq, C), memory: (HW_total, B, C) -> opt_feat (B*Nq, C, feat_sz, feat_sz)."""
    feat_len_s = feat_sz * feat_sz
    HW_total, B, C = memory.shape
    Nq = hs.shape[2]
    hs_b = hs.reshape(B, Nq, C)                     # drop leading 1 (free)
    mem2d = memory.reshape(HW_total, B * C)         # free row-major reshape -> lane-dense

    if HW_total % feat_len_s == 0:
        # Fold the memory[-feat_len_s:] slice into the BlockSpec index_map (zero-cost).
        mem_in = mem2d
        last_blk = HW_total // feat_len_s - 1
        mem_spec = pl.BlockSpec((feat_len_s, B * C), lambda i: (last_blk, 0))
    else:
        # TODO(synk): avoid this XLA tail slice with memory_space=pl.ANY + an in-kernel
        # make_async_copy from pl.ds(HW_total - feat_len_s, feat_len_s); low priority.
        mem_in = mem2d[HW_total - feat_len_s:]
        mem_spec = pl.BlockSpec((feat_len_s, B * C), lambda i: (0, 0))

    kernel = _make_corner_kernel(B, C, _mxu_dtype_for(C))
    opt = pl.pallas_call(
        kernel,
        out_shape=jax.ShapeDtypeStruct((B, Nq, C, feat_len_s), jnp.float32),
        grid=(1,),
        in_specs=[mem_spec,
                  pl.BlockSpec((B, Nq, C), lambda i: (0, 0, 0))],
        out_specs=pl.BlockSpec((B, Nq, C, feat_len_s), lambda i: (0, 0, 0, 0)),
        compiler_params=pltpu.CompilerParams(dimension_semantics=("arbitrary",)),
    )(mem_in, hs_b)

    return opt.reshape(B * Nq, C, feat_sz, feat_sz)


# ----------------------------------------------------------------------------
# Pure-JAX references (mirror the PyTorch ops 1:1)
# ----------------------------------------------------------------------------
def _ref_adjust(src_feat, pos_embed, mask, w, b):
    feat = jnp.einsum("bchw,oc->bohw", src_feat, w,
                      precision=lax.Precision.HIGHEST) + b[None, :, None, None]
    B, C, H, W = feat.shape
    feat_vec = jnp.transpose(feat.reshape(B, C, H * W), (2, 0, 1))
    pos_vec = jnp.transpose(pos_embed.reshape(B, pos_embed.shape[1], H * W), (2, 0, 1))
    return feat_vec, mask.reshape(B, -1), pos_vec


def _ref_corner_fusion(hs, memory, feat_sz):
    feat_len_s = feat_sz * feat_sz
    enc_opt = jnp.transpose(memory[-feat_len_s:], (1, 0, 2))      # (B, HW, C)
    dec_opt = jnp.transpose(hs[0], (0, 2, 1))                     # (B, C, Nq)
    att = jnp.einsum("bhc,bcq->bhq", enc_opt, dec_opt,
                     precision=lax.Precision.HIGHEST)
    opt = enc_opt[..., None] * att[..., None, :]                  # (B, HW, C, Nq)
    opt = jnp.transpose(opt, (0, 3, 2, 1))                        # (B, Nq, C, HW)
    B, Nq, C, HW = opt.shape
    return opt.reshape(B * Nq, C, feat_sz, feat_sz)


# ----------------------------------------------------------------------------
if __name__ == "__main__":
    jax.config.update("jax_default_matmul_precision", "highest")

    # Small, deterministic shapes consistent with the module:
    #   backbone.num_channels = 64, hidden_dim = 32, num_queries = 1,
    #   box_head.feat_sz = 8 -> feat_len_s = 64, search feature map 8x8,
    #   memory length = template(64) + search(64) = 128, batch = 2.
    key = jax.random.PRNGKey(0)
    k_src, k_pos, k_w, k_b, k_q, k_hs, k_mem, k_hs2, k_mem2 = jax.random.split(key, 9)

    B, Cin, H, W = 2, 64, 8, 8
    hidden_dim, num_queries, feat_sz = 32, 1, 8
    hw_total = 2 * feat_sz * feat_sz

    src_feat = jax.random.normal(k_src, (B, Cin, H, W), jnp.float32)       # backbone output (NCHW)
    pos_embed = jax.random.normal(k_pos, (B, hidden_dim, H, W), jnp.float32)
    mask = jnp.zeros((B, H, W), jnp.bool_)                                 # boolean padding mask

    # module parameters (deterministic init, shapes from __init__)
    bottleneck_w = jax.random.normal(k_w, (hidden_dim, Cin), jnp.float32) * 0.02
    bottleneck_b = jax.random.normal(k_b, (hidden_dim,), jnp.float32) * 0.02
    query_embed = jax.random.normal(k_q, (num_queries, hidden_dim), jnp.float32)  # nn.Embedding weight

    # TODO(synk): backbone, transformer, box_head, cls_head/odin_cls are external
    # sub-modules passed into __init__; their internals are not part of EXOTST1,
    # so the transformer output `hs` and encoder memory are supplied as inputs.
    hs = jax.random.normal(k_hs, (1, B, num_queries, hidden_dim), jnp.float32)
    memory = jax.random.normal(k_mem, (hw_total, B, hidden_dim), jnp.float32)

    # --- forward_backbone / adjust path (Pallas bottleneck conv + fused permutes) ---
    seq_dict = adjust(src_feat, pos_embed, mask, bottleneck_w, bottleneck_b)
    feat_vec = jax.block_until_ready(seq_dict["feat"])
    pos_vec = jax.block_until_ready(seq_dict["pos"])

    # --- forward_box_head 'CORNER' fusion path (Pallas att + broadcast mul) ---
    opt_feat = jax.block_until_ready(corner_fusion(hs, memory, feat_sz))

    # correctness check against pure-JAX references of the PyTorch ops
    ref_feat, ref_mask, ref_pos = _ref_adjust(src_feat, pos_embed, mask,
                                              bottleneck_w, bottleneck_b)
    ref_opt = _ref_corner_fusion(hs, memory, feat_sz)

    assert feat_vec.shape == (H * W, B, hidden_dim)
    assert opt_feat.shape == (B * num_queries, hidden_dim, feat_sz, feat_sz)
    assert seq_dict["mask"].dtype == jnp.bool_
    np.testing.assert_allclose(np.asarray(feat_vec), np.asarray(ref_feat),
                               rtol=1e-4, atol=1e-5)
    np.testing.assert_allclose(np.asarray(opt_feat), np.asarray(ref_opt),
                               rtol=1e-4, atol=1e-5)
    np.testing.assert_allclose(np.asarray(pos_vec), np.asarray(ref_pos),
                               rtol=1e-6, atol=1e-6)

    # --- coverage-gap case from the review: Nq > 1 and non-divisible memory length ---
    Nq2, hw_total2 = 2, 96                       # 96 % 64 != 0 -> fallback tail slice
    hs2 = jax.random.normal(k_hs2, (1, B, Nq2, hidden_dim), jnp.float32)
    memory2 = jax.random.normal(k_mem2, (hw_total2, B, hidden_dim), jnp.float32)
    opt_feat2 = jax.block_until_ready(corner_fusion(hs2, memory2, feat_sz))
    ref_opt2 = _ref_corner_fusion(hs2, memory2, feat_sz)
    assert opt_feat2.shape == (B * Nq2, hidden_dim, feat_sz, feat_sz)
    np.testing.assert_allclose(np.asarray(opt_feat2), np.asarray(ref_opt2),
                               rtol=1e-4, atol=1e-5)

    print("KERNEL_OK")
</pallas_src>

<mosaic_0001>
module attributes {stable_mosaic.version = 11 : i64} {
  func.func @kernel(%arg0: i32, %arg1: memref<2x64x64xf32, #tpu.memory_space<vmem>>, %arg2: memref<32x64xf32, #tpu.memory_space<vmem>>, %arg3: memref<1x64xf32, #tpu.memory_space<vmem>>, %arg4: memref<2x32x64xf32, #tpu.memory_space<vmem>>, %arg5: memref<64x64xf32, #tpu.memory_space<vmem>>, %arg6: memref<64x64xf32, #tpu.memory_space<vmem>>) attributes {dimension_semantics = [#tpu.dimension_semantics<arbitrary>], iteration_bounds = array<i64: 1>, scalar_prefetch = 0 : i64, scratch_operands = 0 : i64, tpu.core_type = #tpu.core_type<tc>, window_params = [{pipeline_mode = #tpu.pipeline_mode<synchronous>, transform_indices = @transform_0, window_bounds = array<i64: 2, 64, 64>}, {pipeline_mode = #tpu.pipeline_mode<synchronous>, transform_indices = @transform_1, window_bounds = array<i64: 32, 64>}, {pipeline_mode = #tpu.pipeline_mode<synchronous>, transform_indices = @transform_2, window_bounds = array<i64: 1, 64>}, {pipeline_mode = #tpu.pipeline_mode<synchronous>, transform_indices = @transform_3, window_bounds = array<i64: 2, 32, 64>}, {pipeline_mode = #tpu.pipeline_mode<synchronous>, transform_indices = @transform_4, window_bounds = array<i64: 64, 64>}, {pipeline_mode = #tpu.pipeline_mode<synchronous>, transform_indices = @transform_5, window_bounds = array<i64: 64, 64>}]} {
    %c0 = arith.constant 0 : index
    %c0_0 = arith.constant 0 : index
    %0 = vector.load %arg2[%c0, %c0_0] : memref<32x64xf32, #tpu.memory_space<vmem>>, vector<32x64xf32>
    %c0_1 = arith.constant 0 : index
    %c0_2 = arith.constant 0 : index
    %c0_3 = arith.constant 0 : index
    %1 = vector.load %arg1[%c0_1, %c0_2, %c0_3] : memref<2x64x64xf32, #tpu.memory_space<vmem>>, vector<1x64x64xf32>
    %2 = vector.shape_cast %1 : vector<1x64x64xf32> to vector<64x64xf32>
    %cst = arith.constant dense<0.000000e+00> : vector<32x64xf32>
    %3 = tpu.matmul %0, %2, %cst {dimension_numbers = #tpu.dot_dimension_numbers<[1], [0], [0], [1], [0, 0, 1, 1], [], []>, precision = #tpu.contract_precision<fp32>} : vector<32x64xf32>, vector<64x64xf32>, vector<32x64xf32> -> vector<32x64xf32>
    %c1 = arith.constant 1 : index
    %c0_4 = arith.constant 0 : index
    %c0_5 = arith.constant 0 : index
    %4 = vector.load %arg1[%c1, %c0_4, %c0_5] : memref<2x64x64xf32, #tpu.memory_space<vmem>>, vector<1x64x64xf32>
    %5 = vector.shape_cast %4 : vector<1x64x64xf32> to vector<64x64xf32>
    %cst_6 = arith.constant dense<0.000000e+00> : vector<32x64xf32>
    %6 = tpu.matmul %0, %5, %cst_6 {dimension_numbers = #tpu.dot_dimension_numbers<[1], [0], [0], [1], [0, 0, 1, 1], [], []>, precision = #tpu.contract_precision<fp32>} : vector<32x64xf32>, vector<64x64xf32>, vector<32x64xf32> -> vector<32x64xf32>
    %7 = tpu.concatenate %3, %6 in 0 : vector<32x64xf32>, vector<32x64xf32> -> vector<64x64xf32>
    %8 = tpu.transpose %7, [1, 0] : vector<64x64xf32> -> vector<64x64xf32>
    %c0_7 = arith.constant 0 : index
    %c0_8 = arith.constant 0 : index
    %9 = vector.load %arg3[%c0_7, %c0_8] : memref<1x64xf32, #tpu.memory_space<vmem>>, vector<1x64xf32>
    %10 = vector.broadcast %9 : vector<1x64xf32> to vector<64x64xf32>
    %11 = arith.addf %8, %10 : vector<64x64xf32>
    %c0_9 = arith.constant 0 : index
    %c0_10 = arith.constant 0 : index
    %12 = vector.load %arg5[%c0_9, %c0_10] : memref<64x64xf32, #tpu.memory_space<vmem>>, vector<64x64xf32>
    tpu.vector_store %arg5[%c0_9, %c0_10], %11 {strides = array<i32>} : memref<64x64xf32, #tpu.memory_space<vmem>>, vector<64x64xf32>,
    %c0_11 = arith.constant 0 : index
    %c0_12 = arith.constant 0 : index
    %c0_13 = arith.constant 0 : index
    %13 = vector.load %arg4[%c0_11, %c0_12, %c0_13] : memref<2x32x64xf32, #tpu.memory_space<vmem>>, vector<1x32x64xf32>
    %14 = vector.shape_cast %13 : vector<1x32x64xf32> to vector<32x64xf32>
    %c1_14 = arith.constant 1 : index
    %c0_15 = arith.constant 0 : index
    %c0_16 = arith.constant 0 : index
    %15 = vector.load %arg4[%c1_14, %c0_15, %c0_16] : memref<2x32x64xf32, #tpu.memory_space<vmem>>, vector<1x32x64xf32>
    %16 = vector.shape_cast %15 : vector<1x32x64xf32> to vector<32x64xf32>
    %17 = tpu.concatenate %14, %16 in 0 : vector<32x64xf32>, vector<32x64xf32> -> vector<64x64xf32>
    %18 = tpu.transpose %17, [1, 0] : vector<64x64xf32> -> vector<64x64xf32>
    %c0_17 = arith.constant 0 : index
    %c0_18 = arith.constant 0 : index
    %19 = vector.load %arg6[%c0_17, %c0_18] : memref<64x64xf32, #tpu.memory_space<vmem>>, vector<64x64xf32>
    tpu.vector_store %arg6[%c0_17, %c0_18], %18 {strides = array<i32>} : memref<64x64xf32, #tpu.memory_space<vmem>>, vector<64x64xf32>,
    return
  }
  func.func @transform_0(%arg0: i32) -> (i32, i32, i32) {
    %c0_i32 = arith.constant 0 : i32
    %c0_i32_0 = arith.constant 0 : i32
    %c0_i32_1 = arith.constant 0 : i32
    %c0_i32_2 = arith.constant 0 : i32
    return %c0_i32, %c0_i32_0, %c0_i32_1 : i32, i32, i32
  }
  func.func @transform_1(%arg0: i32) -> (i32, i32) {
    %c0_i32 = arith.constant 0 : i32
    %c0_i32_0 = arith.constant 0 : i32
    %c0_i32_1 = arith.constant 0 : i32
    return %c0_i32, %c0_i32_0 : i32, i32
  }
  func.func @transform_2(%arg0: i32) -> (i32, i32) {
    %c0_i32 = arith.constant 0 : i32
    %c0_i32_0 = arith.constant 0 : i32
    %c0_i32_1 = arith.constant 0 : i32
    return %c0_i32, %c0_i32_0 : i32, i32
  }
  func.func @transform_3(%arg0: i32) -> (i32, i32, i32) {
    %c0_i32 = arith.constant 0 : i32
    %c0_i32_0 = arith.constant 0 : i32
    %c0_i32_1 = arith.constant 0 : i32
    %c0_i32_2 = arith.constant 0 : i32
    return %c0_i32, %c0_i32_0, %c0_i32_1 : i32, i32, i32
  }
  func.func @transform_4(%arg0: i32) -> (i32, i32) {
    %c0_i32 = arith.constant 0 : i32
    %c0_i32_0 = arith.constant 0 : i32
    %c0_i32_1 = arith.constant 0 : i32
    return %c0_i32, %c0_i32_0 : i32, i32
  }
  func.func @transform_5(%arg0: i32) -> (i32, i32) {
    %c0_i32 = arith.constant 0 : i32
    %c0_i32_0 = arith.constant 0 : i32
    %c0_i32_1 = arith.constant 0 : i32
    return %c0_i32, %c0_i32_0 : i32, i32
  }
}

</mosaic_0001>

<llo_original>
// kernel: tpu_custom_call.1
$region0: #{tpu_custom_call.1}
  #allocation0 [shape = 'u32[]', space=smem, size = 0x4, offset = 0x4, fixed_abs, tag = 'smem constant byte address 0x4 - core index']
  #allocation1 [shape = 'u32[144,128]{1,0:T(1,128)}', space=vmem, size = 0x12000, scoped, tag = 'internal scratch']
  %s0 = inlined_call_operand.hbm [shape: f32[2,64,64], index: 0, kind: input, shape index: {}]
  %s1 = inlined_call_operand.hbm [shape: f32[32,64], index: 1, kind: input, shape index: {}]
  %s2 = inlined_call_operand.vmem [shape: f32[1,64], index: 2, kind: input, shape index: {}]
  %s3 = inlined_call_operand.hbm [shape: f32[2,32,64], index: 3, kind: input, shape index: {}]
  %s4 = inlined_call_operand.hbm [shape: f32[64,64], index: 4, kind: output, shape index: {0}]
  %s5 = inlined_call_operand.hbm [shape: f32[64,64], index: 5, kind: output, shape index: {1}]
  %6 = xla_tuple %s4, %s5
  %s7 = sld [smem:[#allocation0]]
  $region46: #{tpu_custom_call.1} parent=0
    _
  %s9 = ssub.s32 1, %s7
  %s10 = scalar_select 0, %s9, %s7
  $region1: #{tpu_custom_call.1} parent=0
    #allocation2 [shape = 'u8[65536]{0}', space=vmem, size = 0x10000, scoped, tag = 'input window, operand 0, single buffered']
    #allocation3 [shape = 's32[1]{0}', space=sflag, size = 0x4, scoped, tag = 'scoped memory for tpu_custom_call.1']
    #allocation4 [shape = 's32[1]{0}', space=sflag, size = 0x4, scoped, tag = 'scoped memory for tpu_custom_call.1']
    #allocation5 [shape = 'u8[16384]{0}', space=vmem, size = 0x4000, scoped, tag = 'input window, operand 1, single buffered']
    #allocation6 [shape = 's32[1]{0}', space=sflag, size = 0x4, scoped, tag = 'scoped memory for tpu_custom_call.1']
    #allocation7 [shape = 'u8[32768]{0}', space=vmem, size = 0x8000, scoped, tag = 'input window, operand 3, single buffered']
    #allocation8 [shape = 'u8[32768]{0}', space=vmem, size = 0x8000, scoped, tag = 'output window, operand 0, single buffered']
    #allocation9 [shape = 'u8[32768]{0}', space=vmem, size = 0x8000, scoped, tag = 'output window, operand 1, single buffered']
    #allocation10 [shape = 's32[1]{0}', space=sflag, size = 0x4, scoped, tag = 'scoped memory for tpu_custom_call.1']
    %11 = vsyncpa [#allocation3], 0
    %12 = vsyncpa [#allocation6], 0
    %13 = vsyncpa [#allocation4], 0
    %14 = vsyncpa [#allocation10], 0
    // Predicated region
    $region2: #{tpu_custom_call.1} parent=1 // pred_check
      _
    $region3: #{tpu_custom_call.1} parent=1 // pred_check_branch
      %16 = sbr.rel (0) target = $region5
    $region4: #{tpu_custom_call.1} parent=1 // pred_region
      %s18 = ssub.s32 2048, 2048
      %19 = vsyncadd [#allocation3], %s18
      %s20 = sshll.u32 [#allocation2], 4
      %s21 = int_to_ptr.vmem [resolvable:$true] %s20
      %26 = dma.hbm_to_vmem [thread:$0]  %s0, 2048, %s21, [#allocation3], 128, 128, 8
    $region5: #{tpu_custom_call.1} parent=1 // pred_fallthru
      _
    // Predicated region
    $region6: #{tpu_custom_call.1} parent=1 // pred_check
      _
    $region7: #{tpu_custom_call.1} parent=1 // pred_check_branch
      %28 = sbr.rel (0) target = $region9
    $region8: #{tpu_custom_call.1} parent=1 // pred_region
      %s30 = ssub.s32 512, 512
      %31 = vsyncadd [#allocation6], %s30
      %s32 = sshll.u32 [#allocation5], 4
      %s33 = int_to_ptr.vmem [resolvable:$true] %s32
      %38 = dma.hbm_to_vmem [thread:$0]  %s1, 512, %s33, [#allocation6], 128, 128, 8
    $region9: #{tpu_custom_call.1} parent=1 // pred_fallthru
      _
    // Predicated region
    $region10: #{tpu_custom_call.1} parent=1 // pred_check
      _
    $region11: #{tpu_custom_call.1} parent=1 // pred_check_branch
      %40 = sbr.rel (0) target = $region13
    $region12: #{tpu_custom_call.1} parent=1 // pred_region
      _
    $region13: #{tpu_custom_call.1} parent=1 // pred_fallthru
      _
    // Predicated region
    $region14: #{tpu_custom_call.1} parent=1 // pred_check
      _
    $region15: #{tpu_custom_call.1} parent=1 // pred_check_branch
      %42 = sbr.rel (0) target = $region17
    $region16: #{tpu_custom_call.1} parent=1 // pred_region
      %s44 = ssub.s32 1024, 1024
      %45 = vsyncadd [#allocation6], %s44
      %s46 = sshll.u32 [#allocation7], 4
      %s47 = int_to_ptr.vmem [resolvable:$true] %s46
      %52 = dma.hbm_to_vmem [thread:$0]  %s3, 1024, %s47, [#allocation6], 128, 128, 8
    $region17: #{tpu_custom_call.1} parent=1 // pred_fallthru
      _
    // Predicated region
    $region18: #{tpu_custom_call.1} parent=1 // pred_check
      _
    $region19: #{tpu_custom_call.1} parent=1 // pred_check_branch
      %54 = sbr.rel (0) target = $region21
    $region20: #{tpu_custom_call.1} parent=1 // pred_region
      %55 = dma.done [#allocation3], 2048
    $region21: #{tpu_custom_call.1} parent=1 // pred_fallthru
      _
    // Predicated region
    $region22: #{tpu_custom_call.1} parent=1 // pred_check
      _
    $region23: #{tpu_custom_call.1} parent=1 // pred_check_branch
      %57 = sbr.rel (0) target = $region25
    $region24: #{tpu_custom_call.1} parent=1 // pred_region
      %58 = dma.done [#allocation6], 512
    $region25: #{tpu_custom_call.1} parent=1 // pred_fallthru
      _
    // Predicated region
    $region26: #{tpu_custom_call.1} parent=1 // pred_check
      _
    $region27: #{tpu_custom_call.1} parent=1 // pred_check_branch
      %60 = sbr.rel (0) target = $region29
    $region28: #{tpu_custom_call.1} parent=1 // pred_region
      %61 = dma.done [#allocation6], 1024
    $region29: #{tpu_custom_call.1} parent=1 // pred_fallthru
      _
    %v62 = vld [vmem:[#allocation5] sm:$0xff]
    %v63 = vld [vmem:[#allocation5 + $0x8] sm:$0xff]
    %v64 = vld [vmem:[#allocation5 + $0x10] sm:$0xff]
    %v65 = vld [vmem:[#allocation5 + $0x18] sm:$0xff]
    %v66 = vld [vmem:[#allocation2] sm:$0xff]
    %v67 = vld [vmem:[#allocation2 + $0x8] sm:$0xff]
    %v68 = vld [vmem:[#allocation2 + $0x10] sm:$0xff]
    %v69 = vld [vmem:[#allocation2 + $0x18] sm:$0xff]
    %v70 = vld [vmem:[#allocation2 + $0x20] sm:$0xff]
    %v71 = vld [vmem:[#allocation2 + $0x28] sm:$0xff]
    %v72 = vld [vmem:[#allocation2 + $0x30] sm:$0xff]
    %v73 = vld [vmem:[#allocation2 + $0x38] sm:$0xff]
    %vm74 = vcmask 523264
    %v76 = vsel %vm74, %v62, 0
    %v79 = vsel %vm74, %v63, 0
    %v82 = vsel %vm74, %v64, 0
    %v85 = vsel %vm74, %v65, 0
    %87 = vmatprep.subr.mxu0 0.0
    %88 = vmatpush1.msra.mxu0 0.0
    %89 = vmatprep.subr.mxu0 0.0
    %90 = vmatpush1.msra.mxu0 0.0
    %91 = vmatprep.subr.mxu0 0.0
    %92 = vmatpush1.msra.mxu0 0.0
    %93 = vmatprep.subr.mxu0 0.0
    %94 = vmatpush1.msra.mxu0 0.0
    %95 = vmatprep.subr.mxu0 0.0
    %96 = vmatpush1.msra.mxu0 0.0
    %97 = vmatprep.subr.mxu0 0.0
    %98 = vmatpush1.msra.mxu0 0.0
    %99 = vmatprep.subr.mxu0 0.0
    %100 = vmatpush1.msra.mxu0 0.0
    %101 = vmatprep.subr.mxu0 0.0
    %102 = vmatpush1.msra.mxu0 0.0
    %103 = vmatprep.subr.mxu0 0.0
    %v104 = vand.u32 %v73, 4294901760
    %105 = vmatpush1.msra.mxu0 %v104
    %106 = vmatprep.subr.mxu0 0.0
    %v107 = vand.u32 %v72, 4294901760
    %108 = vmatpush1.msra.mxu0 %v107
    %109 = vmatprep.subr.mxu0 0.0
    %v110 = vand.u32 %v71, 4294901760
    %111 = vmatpush1.msra.mxu0 %v110
    %112 = vmatprep.subr.mxu0 0.0
    %v113 = vand.u32 %v70, 4294901760
    %114 = vmatpush1.msra.mxu0 %v113
    %115 = vmatprep.subr.mxu0 0.0
    %v116 = vand.u32 %v69, 4294901760
    %117 = vmatpush1.msra.mxu0 %v116
    %118 = vmatprep.subr.mxu0 0.0
    %v119 = vand.u32 %v68, 4294901760
    %120 = vmatpush1.msra.mxu0 %v119
    %121 = vmatprep.subr.mxu0 0.0
    %v122 = vand.u32 %v67, 4294901760
    %123 = vmatpush1.msra.mxu0 %v122
    %124 = vmatprep.subr.mxu0 0.0
    %v125 = vand.u32 %v66, 4294901760
    %126 = vmatpush1.msra.mxu0 %v125
    %127 = vmatprep.subr.mxu0 0.0
    %128 = vmatpush2.msra.mxu0 0.0
    %129 = vmatprep.subr.mxu0 0.0
    %130 = vmatpush2.msra.mxu0 0.0
    %131 = vmatprep.subr.mxu0 0.0
    %132 = vmatpush2.msra.mxu0 0.0
    %133 = vmatprep.subr.mxu0 0.0
    %134 = vmatpush2.msra.mxu0 0.0
    %135 = vmatprep.subr.mxu0 0.0
    %136 = vmatpush2.msra.mxu0 0.0
    %137 = vmatprep.subr.mxu0 0.0
    %138 = vmatpush2.msra.mxu0 0.0
    %139 = vmatprep.subr.mxu0 0.0
    %140 = vmatpush2.msra.mxu0 0.0
    %141 = vmatprep.subr.mxu0 0.0
    %142 = vmatpush2.msra.mxu0 0.0
    %143 = vmatprep.subr.mxu0 0.0
    %144 = vmatpush2.msra.mxu0 0.0
    %145 = vmatprep.subr.mxu0 0.0
    %146 = vmatpush2.msra.mxu0 0.0
    %147 = vmatprep.subr.mxu0 0.0
    %148 = vmatpush2.msra.mxu0 0.0
    %149 = vmatprep.subr.mxu0 0.0
    %150 = vmatpush2.msra.mxu0 0.0
    %151 = vmatprep.subr.mxu0 0.0
    %152 = vmatpush2.msra.mxu0 0.0
    %153 = vmatprep.subr.mxu0 0.0
    %154 = vmatpush2.msra.mxu0 0.0
    %155 = vmatprep.subr.mxu0 0.0
    %156 = vmatpush2.msra.mxu0 0.0
    %157 = vmatprep.subr.mxu0 0.0
    %158 = vmatpush2.msra.mxu0 0.0
    %159 = vmatprep.mubr.f32.mxu0 0.0
    %v160 = vand.u32 %v76, 4294901760
    %v161 = vsub.f32 %v76, %v160
    %v162 = vand.u32 %v161, 4294901760
    %v163 = vsub.f32 %v161, %v162
    %v164 = vand.u32 %v163, 4294901760
    %165 = vmatmul.mubr.f32.gmra.mxu0 %v164
    %v166 = vpop.f32.mrf.mxu0
    %v167 = vadd.f32 0.0, %v166
    %v168 = vpop.f32.mrf.mxu0
    %169 = vmatprep.mubr.f32.mxu0 0.0
    %v170 = vand.u32 %v79, 4294901760
    %v171 = vsub.f32 %v79, %v170
    %v172 = vand.u32 %v171, 4294901760
    %v173 = vsub.f32 %v171, %v172
    %v174 = vand.u32 %v173, 4294901760
    %175 = vmatmul.mubr.f32.gmra.mxu0 %v174
    %v176 = vpop.f32.mrf.mxu0
    %v177 = vadd.f32 0.0, %v176
    %v178 = vpop.f32.mrf.mxu0
    %179 = vmatprep.mubr.f32.mxu0 0.0
    %v180 = vand.u32 %v82, 4294901760
    %v181 = vsub.f32 %v82, %v180
    %v182 = vand.u32 %v181, 4294901760
    %v183 = vsub.f32 %v181, %v182
    %v184 = vand.u32 %v183, 4294901760
    %185 = vmatmul.mubr.f32.gmra.mxu0 %v184
    %v186 = vpop.f32.mrf.mxu0
    %v187 = vadd.f32 0.0, %v186
    %v188 = vpop.f32.mrf.mxu0
    %189 = vmatprep.mubr.f32.mxu0 0.0
    %v190 = vand.u32 %v85, 4294901760
    %v191 = vsub.f32 %v85, %v190
    %v192 = vand.u32 %v191, 4294901760
    %v193 = vsub.f32 %v191, %v192
    %v194 = vand.u32 %v193, 4294901760
    %195 = vmatmul.mubr.f32.gmra.mxu0 %v194
    %v196 = vpop.f32.mrf.mxu0
    %v197 = vadd.f32 0.0, %v196
    %v198 = vpop.f32.mrf.mxu0
    %199 = vdwg.mxu0
    %200 = vmatprep.subr.mxu0 0.0
    %201 = vmatpush1.msra.mxu0 0.0
    %202 = vmatprep.subr.mxu0 0.0
    %203 = vmatpush1.msra.mxu0 0.0
    %204 = vmatprep.subr.mxu0 0.0
    %205 = vmatpush1.msra.mxu0 0.0
    %206 = vmatprep.subr.mxu0 0.0
    %207 = vmatpush1.msra.mxu0 0.0
    %208 = vmatprep.subr.mxu0 0.0
    %209 = vmatpush1.msra.mxu0 0.0
    %210 = vmatprep.subr.mxu0 0.0
    %211 = vmatpush1.msra.mxu0 0.0
    %212 = vmatprep.subr.mxu0 0.0
    %213 = vmatpush1.msra.mxu0 0.0
    %214 = vmatprep.subr.mxu0 0.0
    %215 = vmatpush1.msra.mxu0 0.0
    %216 = vmatprep.subr.mxu0 0.0
    %v217 = vand.u32 %v73, 4294901760
    %v218 = vsub.f32 %v73, %v217
    %v219 = vand.u32 %v218, 4294901760
    %v220 = vsub.f32 %v218, %v219
    %v221 = vand.u32 %v220, 4294901760
    %222 = vmatpush1.msra.mxu0 %v221
    %223 = vmatprep.subr.mxu0 0.0
    %v224 = vand.u32 %v72, 4294901760
    %v225 = vsub.f32 %v72, %v224
    %v226 = vand.u32 %v225, 4294901760
    %v227 = vsub.f32 %v225, %v226
    %v228 = vand.u32 %v227, 4294901760
    %229 = vmatpush1.msra.mxu0 %v228
    %230 = vmatprep.subr.mxu0 0.0
    %v231 = vand.u32 %v71, 4294901760
    %v232 = vsub.f32 %v71, %v231
    %v233 = vand.u32 %v232, 4294901760
    %v234 = vsub.f32 %v232, %v233
    %v235 = vand.u32 %v234, 4294901760
    %236 = vmatpush1.msra.mxu0 %v235
    %237 = vmatprep.subr.mxu0 0.0
    %v238 = vand.u32 %v70, 4294901760
    %v239 = vsub.f32 %v70, %v238
    %v240 = vand.u32 %v239, 4294901760
    %v241 = vsub.f32 %v239, %v240
    %v242 = vand.u32 %v241, 4294901760
    %243 = vmatpush1.msra.mxu0 %v242
    %244 = vmatprep.subr.mxu0 0.0
    %v245 = vand.u32 %v69, 4294901760
    %v246 = vsub.f32 %v69, %v245
    %v247 = vand.u32 %v246, 4294901760
    %v248 = vsub.f32 %v246, %v247
    %v249 = vand.u32 %v248, 4294901760
    %250 = vmatpush1.msra.mxu0 %v249
    %251 = vmatprep.subr.mxu0 0.0
    %v252 = vand.u32 %v68, 4294901760
    %v253 = vsub.f32 %v68, %v252
    %v254 = vand.u32 %v253, 4294901760
    %v255 = vsub.f32 %v253, %v254
    %v256 = vand.u32 %v255, 4294901760
    %257 = vmatpush1.msra.mxu0 %v256
    %258 = vmatprep.subr.mxu0 0.0
    %v259 = vand.u32 %v67, 4294901760
    %v260 = vsub.f32 %v67, %v259
    %v261 = vand.u32 %v260, 4294901760
    %v262 = vsub.f32 %v260, %v261
    %v263 = vand.u32 %v262, 4294901760
    %264 = vmatpush1.msra.mxu0 %v263
    %265 = vmatprep.subr.mxu0 0.0
    %v266 = vand.u32 %v66, 4294901760
    %v267 = vsub.f32 %v66, %v266
    %v268 = vand.u32 %v267, 4294901760
    %v269 = vsub.f32 %v267, %v268
    %v270 = vand.u32 %v269, 4294901760
    %271 = vmatpush1.msra.mxu0 %v270
    %272 = vmatprep.subr.mxu0 0.0
    %273 = vmatpush2.msra.mxu0 0.0
    %274 = vmatprep.subr.mxu0 0.0
    %275 = vmatpush2.msra.mxu0 0.0
    %276 = vmatprep.subr.mxu0 0.0
    %277 = vmatpush2.msra.mxu0 0.0
    %278 = vmatprep.subr.mxu0 0.0
    %279 = vmatpush2.msra.mxu0 0.0
    %280 = vmatprep.subr.mxu0 0.0
    %281 = vmatpush2.msra.mxu0 0.0
    %282 = vmatprep.subr.mxu0 0.0
    %283 = vmatpush2.msra.mxu0 0.0
    %284 = vmatprep.subr.mxu0 0.0
    %285 = vmatpush2.msra.mxu0 0.0
    %286 = vmatprep.subr.mxu0 0.0
    %287 = vmatpush2.msra.mxu0 0.0
    %288 = vmatprep.subr.mxu0 0.0
    %289 = vmatpush2.msra.mxu0 0.0
    %290 = vmatprep.subr.mxu0 0.0
    %291 = vmatpush2.msra.mxu0 0.0
    %292 = vmatprep.subr.mxu0 0.0
    %293 = vmatpush2.msra.mxu0 0.0
    %294 = vmatprep.subr.mxu0 0.0
    %295 = vmatpush2.msra.mxu0 0.0
    %296 = vmatprep.subr.mxu0 0.0
    %297 = vmatpush2.msra.mxu0 0.0
    %298 = vmatprep.subr.mxu0 0.0
    %299 = vmatpush2.msra.mxu0 0.0
    %300 = vmatprep.subr.mxu0 0.0
    %301 = vmatpush2.msra.mxu0 0.0
    %302 = vmatprep.subr.mxu0 0.0
    %303 = vmatpush2.msra.mxu0 0.0
    %304 = vmatprep.mubr.f32.mxu0 0.0
    %v305 = vand.u32 %v76, 4294901760
    %306 = vmatmul.mubr.f32.gmra.mxu0 %v305
    %v307 = vpop.f32.mrf.mxu0
    %v308 = vadd.f32 %v167, %v307
    %v309 = vpop.f32.mrf.mxu0
    %310 = vmatprep.mubr.f32.mxu0 0.0
    %v311 = vand.u32 %v79, 4294901760
    %312 = vmatmul.mubr.f32.gmra.mxu0 %v311
    %v313 = vpop.f32.mrf.mxu0
    %v314 = vadd.f32 %v177, %v313
    %v315 = vpop.f32.mrf.mxu0
    %316 = vmatprep.mubr.f32.mxu0 0.0
    %v317 = vand.u32 %v82, 4294901760
    %318 = vmatmul.mubr.f32.gmra.mxu0 %v317
    %v319 = vpop.f32.mrf.mxu0
    %v320 = vadd.f32 %v187, %v319
    %v321 = vpop.f32.mrf.mxu0
    %322 = vmatprep.mubr.f32.mxu0 0.0
    %v323 = vand.u32 %v85, 4294901760
    %324 = vmatmul.mubr.f32.gmra.mxu0 %v323
    %v325 = vpop.f32.mrf.mxu0
    %v326 = vadd.f32 %v197, %v325
    %v327 = vpop.f32.mrf.mxu0
    %328 = vdwg.mxu0
    %329 = vmatprep.subr.mxu0 0.0
    %330 = vmatpush1.msra.mxu0 0.0
    %331 = vmatprep.subr.mxu0 0.0
    %332 = vmatpush1.msra.mxu0 0.0
    %333 = vmatprep.subr.mxu0 0.0
    %334 = vmatpush1.msra.mxu0 0.0
    %335 = vmatprep.subr.mxu0 0.0
    %336 = vmatpush1.msra.mxu0 0.0
    %337 = vmatprep.subr.mxu0 0.0
    %338 = vmatpush1.msra.mxu0 0.0
    %339 = vmatprep.subr.mxu0 0.0
    %340 = vmatpush1.msra.mxu0 0.0
    %341 = vmatprep.subr.mxu0 0.0
    %342 = vmatpush1.msra.mxu0 0.0
    %343 = vmatprep.subr.mxu0 0.0
    %344 = vmatpush1.msra.mxu0 0.0
    %345 = vmatprep.subr.mxu0 0.0
    %v346 = vand.u32 %v73, 4294901760
    %v347 = vsub.f32 %v73, %v346
    %348 = vmatpush1.msra.mxu0 %v347
    %349 = vmatprep.subr.mxu0 0.0
    %v350 = vand.u32 %v72, 4294901760
    %v351 = vsub.f32 %v72, %v350
    %352 = vmatpush1.msra.mxu0 %v351
    %353 = vmatprep.subr.mxu0 0.0
    %v354 = vand.u32 %v71, 4294901760
    %v355 = vsub.f32 %v71, %v354
    %356 = vmatpush1.msra.mxu0 %v355
    %357 = vmatprep.subr.mxu0 0.0
    %v358 = vand.u32 %v70, 4294901760
    %v359 = vsub.f32 %v70, %v358
    %360 = vmatpush1.msra.mxu0 %v359
    %361 = vmatprep.subr.mxu0 0.0
    %v362 = vand.u32 %v69, 4294901760
    %v363 = vsub.f32 %v69, %v362
    %364 = vmatpush1.msra.mxu0 %v363
    %365 = vmatprep.subr.mxu0 0.0
    %v366 = vand.u32 %v68, 4294901760
    %v367 = vsub.f32 %v68, %v366
    %368 = vmatpush1.msra.mxu0 %v367
    %369 = vmatprep.subr.mxu0 0.0
    %v370 = vand.u32 %v67, 4294901760
    %v371 = vsub.f32 %v67, %v370
    %372 = vmatpush1.msra.mxu0 %v371
    %373 = vmatprep.subr.mxu0 0.0
    %v374 = vand.u32 %v66, 4294901760
    %v375 = vsub.f32 %v66, %v374
    %376 = vmatpush1.msra.mxu0 %v375
    %377 = vmatprep.subr.mxu0 0.0
    %378 = vmatpush2.msra.mxu0 0.0
    %379 = vmatprep.subr.mxu0 0.0
    %380 = vmatpush2.msra.mxu0 0.0
    %381 = vmatprep.subr.mxu0 0.0
    %382 = vmatpush2.msra.mxu0 0.0
    %383 = vmatprep.subr.mxu0 0.0
    %384 = vmatpush2.msra.mxu0 0.0
    %385 = vmatprep.subr.mxu0 0.0
    %386 = vmatpush2.msra.mxu0 0.0
    %387 = vmatprep.subr.mxu0 0.0
    %388 = vmatpush2.msra.mxu0 0.0
    %389 = vmatprep.subr.mxu0 0.0
    %390 = vmatpush2.msra.mxu0 0.0
    %391 = vmatprep.subr.mxu0 0.0
    %392 = vmatpush2.msra.mxu0 0.0
    %393 = vmatprep.subr.mxu0 0.0
    %394 = vmatpush2.msra.mxu0 0.0
    %395 = vmatprep.subr.mxu0 0.0
    %396 = vmatpush2.msra.mxu0 0.0
    %397 = vmatprep.subr.mxu0 0.0
    %398 = vmatpush2.msra.mxu0 0.0
    %399 = vmatprep.subr.mxu0 0.0
    %400 = vmatpush2.msra.mxu0 0.0
    %401 = vmatprep.subr.mxu0 0.0
    %402 = vmatpush2.msra.mxu0 0.0
    %403 = vmatprep.subr.mxu0 0.0
    %404 = vmatpush2.msra.mxu0 0.0
    %405 = vmatprep.subr.mxu0 0.0
    %406 = vmatpush2.msra.mxu0 0.0
    %407 = vmatprep.subr.mxu0 0.0
    %408 = vmatpush2.msra.mxu0 0.0
    %409 = vmatprep.mubr.f32.mxu0 0.0
    %v410 = vand.u32 %v76, 4294901760
    %v411 = vsub.f32 %v76, %v410
    %412 = vmatmul.mubr.f32.gmra.mxu0 %v411
    %v413 = vpop.f32.mrf.mxu0
    %v414 = vadd.f32 %v308, %v413
    %v415 = vpop.f32.mrf.mxu0
    %416 = vmatprep.mubr.f32.mxu0 0.0
    %v417 = vand.u32 %v79, 4294901760
    %v418 = vsub.f32 %v79, %v417
    %419 = vmatmul.mubr.f32.gmra.mxu0 %v418
    %v420 = vpop.f32.mrf.mxu0
    %v421 = vadd.f32 %v314, %v420
    %v422 = vpop.f32.mrf.mxu0
    %423 = vmatprep.mubr.f32.mxu0 0.0
    %v424 = vand.u32 %v82, 4294901760
    %v425 = vsub.f32 %v82, %v424
    %426 = vmatmul.mubr.f32.gmra.mxu0 %v425
    %v427 = vpop.f32.mrf.mxu0
    %v428 = vadd.f32 %v320, %v427
    %v429 = vpop.f32.mrf.mxu0
    %430 = vmatprep.mubr.f32.mxu0 0.0
    %v431 = vand.u32 %v85, 4294901760
    %v432 = vsub.f32 %v85, %v431
    %433 = vmatmul.mubr.f32.gmra.mxu0 %v432
    %v434 = vpop.f32.mrf.mxu0
    %v435 = vadd.f32 %v326, %v434
    %v436 = vpop.f32.mrf.mxu0
    %437 = vdwg.mxu0
    %438 = vmatprep.subr.mxu0 0.0
    %439 = vmatpush1.msra.mxu0 0.0
    %440 = vmatprep.subr.mxu0 0.0
    %441 = vmatpush1.msra.mxu0 0.0
    %442 = vmatprep.subr.mxu0 0.0
    %443 = vmatpush1.msra.mxu0 0.0
    %444 = vmatprep.subr.mxu0 0.0
    %445 = vmatpush1.msra.mxu0 0.0
    %446 = vmatprep.subr.mxu0 0.0
    %447 = vmatpush1.msra.mxu0 0.0
    %448 = vmatprep.subr.mxu0 0.0
    %449 = vmatpush1.msra.mxu0 0.0
    %450 = vmatprep.subr.mxu0 0.0
    %451 = vmatpush1.msra.mxu0 0.0
    %452 = vmatprep.subr.mxu0 0.0
    %453 = vmatpush1.msra.mxu0 0.0
    %454 = vmatprep.subr.mxu0 0.0
    %v455 = vand.u32 %v73, 4294901760
    %456 = vmatpush1.msra.mxu0 %v455
    %457 = vmatprep.subr.mxu0 0.0
    %v458 = vand.u32 %v72, 4294901760
    %459 = vmatpush1.msra.mxu0 %v458
    %460 = vmatprep.subr.mxu0 0.0
    %v461 = vand.u32 %v71, 4294901760
    %462 = vmatpush1.msra.mxu0 %v461
    %463 = vmatprep.subr.mxu0 0.0
    %v464 = vand.u32 %v70, 4294901760
    %465 = vmatpush1.msra.mxu0 %v464
    %466 = vmatprep.subr.mxu0 0.0
    %v467 = vand.u32 %v69, 4294901760
    %468 = vmatpush1.msra.mxu0 %v467
    %469 = vmatprep.subr.mxu0 0.0
    %v470 = vand.u32 %v68, 4294901760
    %471 = vmatpush1.msra.mxu0 %v470
    %472 = vmatprep.subr.mxu0 0.0
    %v473 = vand.u32 %v67, 4294901760
    %474 = vmatpush1.msra.mxu0 %v473
    %475 = vmatprep.subr.mxu0 0.0
    %v476 = vand.u32 %v66, 4294901760
    %477 = vmatpush1.msra.mxu0 %v476
    %478 = vmatprep.subr.mxu0 0.0
    %479 = vmatpush2.msra.mxu0 0.0
    %480 = vmatprep.subr.mxu0 0.0
    %481 = vmatpush2.msra.mxu0 0.0
    %482 = vmatprep.subr.mxu0 0.0
    %483 = vmatpush2.msra.mxu0 0.0
    %484 = vmatprep.subr.mxu0 0.0
    %485 = vmatpush2.msra.mxu0 0.0
    %486 = vmatprep.subr.mxu0 0.0
    %487 = vmatpush2.msra.mxu0 0.0
    %488 = vmatprep.subr.mxu0 0.0
    %489 = vmatpush2.msra.mxu0 0.0
    %490 = vmatprep.subr.mxu0 0.0
    %491 = vmatpush2.msra.mxu0 0.0
    %492 = vmatprep.subr.mxu0 0.0
    %493 = vmatpush2.msra.mxu0 0.0
    %494 = vmatprep.subr.mxu0 0.0
    %495 = vmatpush2.msra.mxu0 0.0
    %496 = vmatprep.subr.mxu0 0.0
    %497 = vmatpush2.msra.mxu0 0.0
    %498 = vmatprep.subr.mxu0 0.0
    %499 = vmatpush2.msra.mxu0 0.0
    %500 = vmatprep.subr.mxu0 0.0
    %501 = vmatpush2.msra.mxu0 0.0
    %502 = vmatprep.subr.mxu0 0.0
    %503 = vmatpush2.msra.mxu0 0.0
    %504 = vmatprep.subr.mxu0 0.0
    %505 = vmatpush2.msra.mxu0 0.0
    %506 = vmatprep.subr.mxu0 0.0
    %507 = vmatpush2.msra.mxu0 0.0
    %508 = vmatprep.subr.mxu0 0.0
    %509 = vmatpush2.msra.mxu0 0.0
    %510 = vmatprep.mubr.f32.mxu0 0.0
    %v511 = vand.u32 %v76, 4294901760
    %v512 = vsub.f32 %v76, %v511
    %v513 = vand.u32 %v512, 4294901760
    %514 = vmatmul.mubr.f32.gmra.mxu0 %v513
    %v515 = vpop.f32.mrf.mxu0
    %v516 = vadd.f32 %v414, %v515
    %v517 = vpop.f32.mrf.mxu0
    %518 = vmatprep.mubr.f32.mxu0 0.0
    %v519 = vand.u32 %v79, 4294901760
    %v520 = vsub.f32 %v79, %v519
    %v521 = vand.u32 %v520, 4294901760
    %522 = vmatmul.mubr.f32.gmra.mxu0 %v521
    %v523 = vpop.f32.mrf.mxu0
    %v524 = vadd.f32 %v421, %v523
    %v525 = vpop.f32.mrf.mxu0
    %526 = vmatprep.mubr.f32.mxu0 0.0
    %v527 = vand.u32 %v82, 4294901760
    %v528 = vsub.f32 %v82, %v527
    %v529 = vand.u32 %v528, 4294901760
    %530 = vmatmul.mubr.f32.gmra.mxu0 %v529
    %v531 = vpop.f32.mrf.mxu0
    %v532 = vadd.f32 %v428, %v531
    %v533 = vpop.f32.mrf.mxu0
    %534 = vmatprep.mubr.f32.mxu0 0.0
    %v535 = vand.u32 %v85, 4294901760
    %v536 = vsub.f32 %v85, %v535
    %v537 = vand.u32 %v536, 4294901760
    %538 = vmatmul.mubr.f32.gmra.mxu0 %v537
    %v539 = vpop.f32.mrf.mxu0
    %v540 = vadd.f32 %v435, %v539
    %v541 = vpop.f32.mrf.mxu0
    %542 = vdwg.mxu0
    %543 = vmatprep.subr.mxu0 0.0
    %544 = vmatpush1.msra.mxu0 0.0
    %545 = vmatprep.subr.mxu0 0.0
    %546 = vmatpush1.msra.mxu0 0.0
    %547 = vmatprep.subr.mxu0 0.0
    %548 = vmatpush1.msra.mxu0 0.0
    %549 = vmatprep.subr.mxu0 0.0
    %550 = vmatpush1.msra.mxu0 0.0
    %551 = vmatprep.subr.mxu0 0.0
    %552 = vmatpush1.msra.mxu0 0.0
    %553 = vmatprep.subr.mxu0 0.0
    %554 = vmatpush1.msra.mxu0 0.0
    %555 = vmatprep.subr.mxu0 0.0
    %556 = vmatpush1.msra.mxu0 0.0
    %557 = vmatprep.subr.mxu0 0.0
    %558 = vmatpush1.msra.mxu0 0.0
    %559 = vmatprep.subr.mxu0 0.0
    %v560 = vand.u32 %v73, 4294901760
    %v561 = vsub.f32 %v73, %v560
    %v562 = vand.u32 %v561, 4294901760
    %563 = vmatpush1.msra.mxu0 %v562
    %564 = vmatprep.subr.mxu0 0.0
    %v565 = vand.u32 %v72, 4294901760
    %v566 = vsub.f32 %v72, %v565
    %v567 = vand.u32 %v566, 4294901760
    %568 = vmatpush1.msra.mxu0 %v567
    %569 = vmatprep.subr.mxu0 0.0
    %v570 = vand.u32 %v71, 4294901760
    %v571 = vsub.f32 %v71, %v570
    %v572 = vand.u32 %v571, 4294901760
    %573 = vmatpush1.msra.mxu0 %v572
    %574 = vmatprep.subr.mxu0 0.0
    %v575 = vand.u32 %v70, 4294901760
    %v576 = vsub.f32 %v70, %v575
    %v577 = vand.u32 %v576, 4294901760
    %578 = vmatpush1.msra.mxu0 %v577
    %579 = vmatprep.subr.mxu0 0.0
    %v580 = vand.u32 %v69, 4294901760
    %v581 = vsub.f32 %v69, %v580
    %v582 = vand.u32 %v581, 4294901760
    %583 = vmatpush1.msra.mxu0 %v582
    %584 = vmatprep.subr.mxu0 0.0
    %v585 = vand.u32 %v68, 4294901760
    %v586 = vsub.f32 %v68, %v585
    %v587 = vand.u32 %v586, 4294901760
    %588 = vmatpush1.msra.mxu0 %v587
    %589 = vmatprep.subr.mxu0 0.0
    %v590 = vand.u32 %v67, 4294901760
    %v591 = vsub.f32 %v67, %v590
    %v592 = vand.u32 %v591, 4294901760
    %593 = vmatpush1.msra.mxu0 %v592
    %594 = vmatprep.subr.mxu0 0.0
    %v595 = vand.u32 %v66, 4294901760
    %v596 = vsub.f32 %v66, %v595
    %v597 = vand.u32 %v596, 4294901760
    %598 = vmatpush1.msra.mxu0 %v597
    %599 = vmatprep.subr.mxu0 0.0
    %600 = vmatpush2.msra.mxu0 0.0
    %601 = vmatprep.subr.mxu0 0.0
    %602 = vmatpush2.msra.mxu0 0.0
    %603 = vmatprep.subr.mxu0 0.0
    %604 = vmatpush2.msra.mxu0 0.0
    %605 = vmatprep.subr.mxu0 0.0
    %606 = vmatpush2.msra.mxu0 0.0
    %607 = vmatprep.subr.mxu0 0.0
    %608 = vmatpush2.msra.mxu0 0.0
    %609 = vmatprep.subr.mxu0 0.0
    %610 = vmatpush2.msra.mxu0 0.0
    %611 = vmatprep.subr.mxu0 0.0
    %612 = vmatpush2.msra.mxu0 0.0
    %613 = vmatprep.subr.mxu0 0.0
    %614 = vmatpush2.msra.mxu0 0.0
    %615 = vmatprep.subr.mxu0 0.0
    %616 = vmatpush2.msra.mxu0 0.0
    %617 = vmatprep.subr.mxu0 0.0
    %618 = vmatpush2.msra.mxu0 0.0
    %619 = vmatprep.subr.mxu0 0.0
    %620 = vmatpush2.msra.mxu0 0.0
    %621 = vmatprep.subr.mxu0 0.0
    %622 = vmatpush2.msra.mxu0 0.0
    %623 = vmatprep.subr.mxu0 0.0
    %624 = vmatpush2.msra.mxu0 0.0
    %625 = vmatprep.subr.mxu0 0.0
    %626 = vmatpush2.msra.mxu0 0.0
    %627 = vmatprep.subr.mxu0 0.0
    %628 = vmatpush2.msra.mxu0 0.0
    %629 = vmatprep.subr.mxu0 0.0
    %630 = vmatpush2.msra.mxu0 0.0
    %631 = vmatprep.mubr.f32.mxu0 0.0
    %v632 = vand.u32 %v76, 4294901760
    %633 = vmatmul.mubr.f32.gmra.mxu0 %v632
    %v634 = vpop.f32.mrf.mxu0
    %v635 = vadd.f32 %v516, %v634
    %v636 = vpop.f32.mrf.mxu0
    %637 = vmatprep.mubr.f32.mxu0 0.0
    %v638 = vand.u32 %v79, 4294901760
    %639 = vmatmul.mubr.f32.gmra.mxu0 %v638
    %v640 = vpop.f32.mrf.mxu0
    %v641 = vadd.f32 %v524, %v640
    %v642 = vpop.f32.mrf.mxu0
    %643 = vmatprep.mubr.f32.mxu0 0.0
    %v644 = vand.u32 %v82, 4294901760
    %645 = vmatmul.mubr.f32.gmra.mxu0 %v644
    %v646 = vpop.f32.mrf.mxu0
    %v647 = vadd.f32 %v532, %v646
    %v648 = vpop.f32.mrf.mxu0
    %649 = vmatprep.mubr.f32.mxu0 0.0
    %v650 = vand.u32 %v85, 4294901760
    %651 = vmatmul.mubr.f32.gmra.mxu0 %v650
    %v652 = vpop.f32.mrf.mxu0
    %v653 = vadd.f32 %v540, %v652
    %v654 = vpop.f32.mrf.mxu0
    %655 = vdwg.mxu0
    %656 = vmatprep.subr.mxu0 0.0
    %657 = vmatpush1.msra.mxu0 0.0
    %658 = vmatprep.subr.mxu0 0.0
    %659 = vmatpush1.msra.mxu0 0.0
    %660 = vmatprep.subr.mxu0 0.0
    %661 = vmatpush1.msra.mxu0 0.0
    %662 = vmatprep.subr.mxu0 0.0
    %663 = vmatpush1.msra.mxu0 0.0
    %664 = vmatprep.subr.mxu0 0.0
    %665 = vmatpush1.msra.mxu0 0.0
    %666 = vmatprep.subr.mxu0 0.0
    %667 = vmatpush1.msra.mxu0 0.0
    %668 = vmatprep.subr.mxu0 0.0
    %669 = vmatpush1.msra.mxu0 0.0
    %670 = vmatprep.subr.mxu0 0.0
    %671 = vmatpush1.msra.mxu0 0.0
    %672 = vmatprep.subr.mxu0 0.0
    %v673 = vand.u32 %v73, 4294901760
    %674 = vmatpush1.msra.mxu0 %v673
    %675 = vmatprep.subr.mxu0 0.0
    %v676 = vand.u32 %v72, 4294901760
    %677 = vmatpush1.msra.mxu0 %v676
    %678 = vmatprep.subr.mxu0 0.0
    %v679 = vand.u32 %v71, 4294901760
    %680 = vmatpush1.msra.mxu0 %v679
    %681 = vmatprep.subr.mxu0 0.0
    %v682 = vand.u32 %v70, 4294901760
    %683 = vmatpush1.msra.mxu0 %v682
    %684 = vmatprep.subr.mxu0 0.0
    %v685 = vand.u32 %v69, 4294901760
    %686 = vmatpush1.msra.mxu0 %v685
    %687 = vmatprep.subr.mxu0 0.0
    %v688 = vand.u32 %v68, 4294901760
    %689 = vmatpush1.msra.mxu0 %v688
    %690 = vmatprep.subr.mxu0 0.0
    %v691 = vand.u32 %v67, 4294901760
    %692 = vmatpush1.msra.mxu0 %v691
    %693 = vmatprep.subr.mxu0 0.0
    %v694 = vand.u32 %v66, 4294901760
    %695 = vmatpush1.msra.mxu0 %v694
    %696 = vmatprep.subr.mxu0 0.0
    %697 = vmatpush2.msra.mxu0 0.0
    %698 = vmatprep.subr.mxu0 0.0
    %699 = vmatpush2.msra.mxu0 0.0
    %700 = vmatprep.subr.mxu0 0.0
    %701 = vmatpush2.msra.mxu0 0.0
    %702 = vmatprep.subr.mxu0 0.0
    %703 = vmatpush2.msra.mxu0 0.0
    %704 = vmatprep.subr.mxu0 0.0
    %705 = vmatpush2.msra.mxu0 0.0
    %706 = vmatprep.subr.mxu0 0.0
    %707 = vmatpush2.msra.mxu0 0.0
    %708 = vmatprep.subr.mxu0 0.0
    %709 = vmatpush2.msra.mxu0 0.0
    %710 = vmatprep.subr.mxu0 0.0
    %711 = vmatpush2.msra.mxu0 0.0
    %712 = vmatprep.subr.mxu0 0.0
    %713 = vmatpush2.msra.mxu0 0.0
    %714 = vmatprep.subr.mxu0 0.0
    %715 = vmatpush2.msra.mxu0 0.0
    %716 = vmatprep.subr.mxu0 0.0
    %717 = vmatpush2.msra.mxu0 0.0
    %718 = vmatprep.subr.mxu0 0.0
    %719 = vmatpush2.msra.mxu0 0.0
    %720 = vmatprep.subr.mxu0 0.0
    %721 = vmatpush2.msra.mxu0 0.0
    %722 = vmatprep.subr.mxu0 0.0
    %723 = vmatpush2.msra.mxu0 0.0
    %724 = vmatprep.subr.mxu0 0.0
    %725 = vmatpush2.msra.mxu0 0.0
    %726 = vmatprep.subr.mxu0 0.0
    %727 = vmatpush2.msra.mxu0 0.0
    %728 = vmatprep.mubr.f32.mxu0 0.0
    %v729 = vand.u32 %v76, 4294901760
    %730 = vmatmul.mubr.f32.gmra.mxu0 %v729
    %v731 = vpop.f32.mrf.mxu0
    %v732 = vadd.f32 %v635, %v731
    %v733 = vpop.f32.mrf.mxu0
    %734 = vmatprep.mubr.f32.mxu0 0.0
    %v735 = vand.u32 %v79, 4294901760
    %736 = vmatmul.mubr.f32.gmra.mxu0 %v735
    %v737 = vpop.f32.mrf.mxu0
    %v738 = vadd.f32 %v641, %v737
    %v739 = vpop.f32.mrf.mxu0
    %740 = vmatprep.mubr.f32.mxu0 0.0
    %v741 = vand.u32 %v82, 4294901760
    %742 = vmatmul.mubr.f32.gmra.mxu0 %v741
    %v743 = vpop.f32.mrf.mxu0
    %v744 = vadd.f32 %v647, %v743
    %v745 = vpop.f32.mrf.mxu0
    %746 = vmatprep.mubr.f32.mxu0 0.0
    %v747 = vand.u32 %v85, 4294901760
    %748 = vmatmul.mubr.f32.gmra.mxu0 %v747
    %v749 = vpop.f32.mrf.mxu0
    %v750 = vadd.f32 %v653, %v749
    %v751 = vpop.f32.mrf.mxu0
    %752 = vdwg.mxu0
    %s753 = scalar_lea.vmem [#allocation2], 64
    %v754 = vld [vmem:[%s753] sm:$0xff]
    %v755 = vld [vmem:[%s753 + $0x8] sm:$0xff]
    %v756 = vld [vmem:[%s753 + $0x10] sm:$0xff]
    %v757 = vld [vmem:[%s753 + $0x18] sm:$0xff]
    %v758 = vld [vmem:[%s753 + $0x20] sm:$0xff]
    %v759 = vld [vmem:[%s753 + $0x28] sm:$0xff]
    %v760 = vld [vmem:[%s753 + $0x30] sm:$0xff]
    %v761 = vld [vmem:[%s753 + $0x38] sm:$0xff]
    %762 = vmatprep.subr.mxu0 0.0
    %763 = vmatpush1.msra.mxu0 0.0
    %764 = vmatprep.subr.mxu0 0.0
    %765 = vmatpush1.msra.mxu0 0.0
    %766 = vmatprep.subr.mxu0 0.0
    %767 = vmatpush1.msra.mxu0 0.0
    %768 = vmatprep.subr.mxu0 0.0
    %769 = vmatpush1.msra.mxu0 0.0
    %770 = vmatprep.subr.mxu0 0.0
    %771 = vmatpush1.msra.mxu0 0.0
    %772 = vmatprep.subr.mxu0 0.0
    %773 = vmatpush1.msra.mxu0 0.0
    %774 = vmatprep.subr.mxu0 0.0
    %775 = vmatpush1.msra.mxu0 0.0
    %776 = vmatprep.subr.mxu0 0.0
    %777 = vmatpush1.msra.mxu0 0.0
    %778 = vmatprep.subr.mxu0 0.0
    %v779 = vand.u32 %v761, 4294901760
    %780 = vmatpush1.msra.mxu0 %v779
    %781 = vmatprep.subr.mxu0 0.0
    %v782 = vand.u32 %v760, 4294901760
    %783 = vmatpush1.msra.mxu0 %v782
    %784 = vmatprep.subr.mxu0 0.0
    %v785 = vand.u32 %v759, 4294901760
    %786 = vmatpush1.msra.mxu0 %v785
    %787 = vmatprep.subr.mxu0 0.0
    %v788 = vand.u32 %v758, 4294901760
    %789 = vmatpush1.msra.mxu0 %v788
    %790 = vmatprep.subr.mxu0 0.0
    %v791 = vand.u32 %v757, 4294901760
    %792 = vmatpush1.msra.mxu0 %v791
    %793 = vmatprep.subr.mxu0 0.0
    %v794 = vand.u32 %v756, 4294901760
    %795 = vmatpush1.msra.mxu0 %v794
    %796 = vmatprep.subr.mxu0 0.0
    %v797 = vand.u32 %v755, 4294901760
    %798 = vmatpush1.msra.mxu0 %v797
    %799 = vmatprep.subr.mxu0 0.0
    %v800 = vand.u32 %v754, 4294901760
    %801 = vmatpush1.msra.mxu0 %v800
    %802 = vmatprep.subr.mxu0 0.0
    %803 = vmatpush2.msra.mxu0 0.0
    %804 = vmatprep.subr.mxu0 0.0
    %805 = vmatpush2.msra.mxu0 0.0
    %806 = vmatprep.subr.mxu0 0.0
    %807 = vmatpush2.msra.mxu0 0.0
    %808 = vmatprep.subr.mxu0 0.0
    %809 = vmatpush2.msra.mxu0 0.0
    %810 = vmatprep.subr.mxu0 0.0
    %811 = vmatpush2.msra.mxu0 0.0
    %812 = vmatprep.subr.mxu0 0.0
    %813 = vmatpush2.msra.mxu0 0.0
    %814 = vmatprep.subr.mxu0 0.0
    %815 = vmatpush2.msra.mxu0 0.0
    %816 = vmatprep.subr.mxu0 0.0
    %817 = vmatpush2.msra.mxu0 0.0
    %818 = vmatprep.subr.mxu0 0.0
    %819 = vmatpush2.msra.mxu0 0.0
    %820 = vmatprep.subr.mxu0 0.0
    %821 = vmatpush2.msra.mxu0 0.0
    %822 = vmatprep.subr.mxu0 0.0
    %823 = vmatpush2.msra.mxu0 0.0
    %824 = vmatprep.subr.mxu0 0.0
    %825 = vmatpush2.msra.mxu0 0.0
    %826 = vmatprep.subr.mxu0 0.0
    %827 = vmatpush2.msra.mxu0 0.0
    %828 = vmatprep.subr.mxu0 0.0
    %829 = vmatpush2.msra.mxu0 0.0
    %830 = vmatprep.subr.mxu0 0.0
    %831 = vmatpush2.msra.mxu0 0.0
    %832 = vmatprep.subr.mxu0 0.0
    %833 = vmatpush2.msra.mxu0 0.0
    %834 = vmatprep.mubr.f32.mxu0 0.0
    %v835 = vand.u32 %v76, 4294901760
    %v836 = vsub.f32 %v76, %v835
    %v837 = vand.u32 %v836, 4294901760
    %v838 = vsub.f32 %v836, %v837
    %v839 = vand.u32 %v838, 4294901760
    %840 = vmatmul.mubr.f32.gmra.mxu0 %v839
    %v841 = vpop.f32.mrf.mxu0
    %v842 = vadd.f32 0.0, %v841
    %v843 = vpop.f32.mrf.mxu0
    %844 = vmatprep.mubr.f32.mxu0 0.0
    %v845 = vand.u32 %v79, 4294901760
    %v846 = vsub.f32 %v79, %v845
    %v847 = vand.u32 %v846, 4294901760
    %v848 = vsub.f32 %v846, %v847
    %v849 = vand.u32 %v848, 4294901760
    %850 = vmatmul.mubr.f32.gmra.mxu0 %v849
    %v851 = vpop.f32.mrf.mxu0
    %v852 = vadd.f32 0.0, %v851
    %v853 = vpop.f32.mrf.mxu0
    %854 = vmatprep.mubr.f32.mxu0 0.0
    %v855 = vand.u32 %v82, 4294901760
    %v856 = vsub.f32 %v82, %v855
    %v857 = vand.u32 %v856, 4294901760
    %v858 = vsub.f32 %v856, %v857
    %v859 = vand.u32 %v858, 4294901760
    %860 = vmatmul.mubr.f32.gmra.mxu0 %v859
    %v861 = vpop.f32.mrf.mxu0
    %v862 = vadd.f32 0.0, %v861
    %v863 = vpop.f32.mrf.mxu0
    %864 = vmatprep.mubr.f32.mxu0 0.0
    %v865 = vand.u32 %v85, 4294901760
    %v866 = vsub.f32 %v85, %v865
    %v867 = vand.u32 %v866, 4294901760
    %v868 = vsub.f32 %v866, %v867
    %v869 = vand.u32 %v868, 4294901760
    %870 = vmatmul.mubr.f32.gmra.mxu0 %v869
    %v871 = vpop.f32.mrf.mxu0
    %v872 = vadd.f32 0.0, %v871
    %v873 = vpop.f32.mrf.mxu0
    %874 = vdwg.mxu0
    %875 = vmatprep.subr.mxu0 0.0
    %876 = vmatpush1.msra.mxu0 0.0
    %877 = vmatprep.subr.mxu0 0.0
    %878 = vmatpush1.msra.mxu0 0.0
    %879 = vmatprep.subr.mxu0 0.0
    %880 = vmatpush1.msra.mxu0 0.0
    %881 = vmatprep.subr.mxu0 0.0
    %882 = vmatpush1.msra.mxu0 0.0
    %883 = vmatprep.subr.mxu0 0.0
    %884 = vmatpush1.msra.mxu0 0.0
    %885 = vmatprep.subr.mxu0 0.0
    %886 = vmatpush1.msra.mxu0 0.0
    %887 = vmatprep.subr.mxu0 0.0
    %888 = vmatpush1.msra.mxu0 0.0
    %889 = vmatprep.subr.mxu0 0.0
    %890 = vmatpush1.msra.mxu0 0.0
    %891 = vmatprep.subr.mxu0 0.0
    %v892 = vand.u32 %v761, 4294901760
    %v893 = vsub.f32 %v761, %v892
    %v894 = vand.u32 %v893, 4294901760
    %v895 = vsub.f32 %v893, %v894
    %v896 = vand.u32 %v895, 4294901760
    %897 = vmatpush1.msra.mxu0 %v896
    %898 = vmatprep.subr.mxu0 0.0
    %v899 = vand.u32 %v760, 4294901760
    %v900 = vsub.f32 %v760, %v899
    %v901 = vand.u32 %v900, 4294901760
    %v902 = vsub.f32 %v900, %v901
    %v903 = vand.u32 %v902, 4294901760
    %904 = vmatpush1.msra.mxu0 %v903
    %905 = vmatprep.subr.mxu0 0.0
    %v906 = vand.u32 %v759, 4294901760
    %v907 = vsub.f32 %v759, %v906
    %v908 = vand.u32 %v907, 4294901760
    %v909 = vsub.f32 %v907, %v908
    %v910 = vand.u32 %v909, 4294901760
    %911 = vmatpush1.msra.mxu0 %v910
    %912 = vmatprep.subr.mxu0 0.0
    %v913 = vand.u32 %v758, 4294901760
    %v914 = vsub.f32 %v758, %v913
    %v915 = vand.u32 %v914, 4294901760
    %v916 = vsub.f32 %v914, %v915
    %v917 = vand.u32 %v916, 4294901760
    %918 = vmatpush1.msra.mxu0 %v917
    %919 = vmatprep.subr.mxu0 0.0
    %v920 = vand.u32 %v757, 4294901760
    %v921 = vsub.f32 %v757, %v920
    %v922 = vand.u32 %v921, 4294901760
    %v923 = vsub.f32 %v921, %v922
    %v924 = vand.u32 %v923, 4294901760
    %925 = vmatpush1.msra.mxu0 %v924
    %926 = vmatprep.subr.mxu0 0.0
    %v927 = vand.u32 %v756, 4294901760
    %v928 = vsub.f32 %v756, %v927
    %v929 = vand.u32 %v928, 4294901760
    %v930 = vsub.f32 %v928, %v929
    %v931 = vand.u32 %v930, 4294901760
    %932 = vmatpush1.msra.mxu0 %v931
    %933 = vmatprep.subr.mxu0 0.0
    %v934 = vand.u32 %v755, 4294901760
    %v935 = vsub.f32 %v755, %v934
    %v936 = vand.u32 %v935, 4294901760
    %v937 = vsub.f32 %v935, %v936
    %v938 = vand.u32 %v937, 4294901760
    %939 = vmatpush1.msra.mxu0 %v938
    %940 = vmatprep.subr.mxu0 0.0
    %v941 = vand.u32 %v754, 4294901760
    %v942 = vsub.f32 %v754, %v941
    %v943 = vand.u32 %v942, 4294901760
    %v944 = vsub.f32 %v942, %v943
    %v945 = vand.u32 %v944, 4294901760
    %946 = vmatpush1.msra.mxu0 %v945
    %947 = vmatprep.subr.mxu0 0.0
    %948 = vmatpush2.msra.mxu0 0.0
    %949 = vmatprep.subr.mxu0 0.0
    %950 = vmatpush2.msra.mxu0 0.0
    %951 = vmatprep.subr.mxu0 0.0
    %952 = vmatpush2.msra.mxu0 0.0
    %953 = vmatprep.subr.mxu0 0.0
    %954 = vmatpush2.msra.mxu0 0.0
    %955 = vmatprep.subr.mxu0 0.0
    %956 = vmatpush2.msra.mxu0 0.0
    %957 = vmatprep.subr.mxu0 0.0
    %958 = vmatpush2.msra.mxu0 0.0
    %959 = vmatprep.subr.mxu0 0.0
    %960 = vmatpush2.msra.mxu0 0.0
    %961 = vmatprep.subr.mxu0 0.0
    %962 = vmatpush2.msra.mxu0 0.0
    %963 = vmatprep.subr.mxu0 0.0
    %964 = vmatpush2.msra.mxu0 0.0
    %965 = vmatprep.subr.mxu0 0.0
    %966 = vmatpush2.msra.mxu0 0.0
    %967 = vmatprep.subr.mxu0 0.0
    %968 = vmatpush2.msra.mxu0 0.0
    %969 = vmatprep.subr.mxu0 0.0
    %970 = vmatpush2.msra.mxu0 0.0
    %971 = vmatprep.subr.mxu0 0.0
    %972 = vmatpush2.msra.mxu0 0.0
    %973 = vmatprep.subr.mxu0 0.0
    %974 = vmatpush2.msra.mxu0 0.0
    %975 = vmatprep.subr.mxu0 0.0
    %976 = vmatpush2.msra.mxu0 0.0
    %977 = vmatprep.subr.mxu0 0.0
    %978 = vmatpush2.msra.mxu0 0.0
    %979 = vmatprep.mubr.f32.mxu0 0.0
    %v980 = vand.u32 %v76, 4294901760
    %981 = vmatmul.mubr.f32.gmra.mxu0 %v980
    %v982 = vpop.f32.mrf.mxu0
    %v983 = vadd.f32 %v842, %v982
    %v984 = vpop.f32.mrf.mxu0
    %985 = vmatprep.mubr.f32.mxu0 0.0
    %v986 = vand.u32 %v79, 4294901760
    %987 = vmatmul.mubr.f32.gmra.mxu0 %v986
    %v988 = vpop.f32.mrf.mxu0
    %v989 = vadd.f32 %v852, %v988
    %v990 = vpop.f32.mrf.mxu0
    %991 = vmatprep.mubr.f32.mxu0 0.0
    %v992 = vand.u32 %v82, 4294901760
    %993 = vmatmul.mubr.f32.gmra.mxu0 %v992
    %v994 = vpop.f32.mrf.mxu0
    %v995 = vadd.f32 %v862, %v994
    %v996 = vpop.f32.mrf.mxu0
    %997 = vmatprep.mubr.f32.mxu0 0.0
    %v998 = vand.u32 %v85, 4294901760
    %999 = vmatmul.mubr.f32.gmra.mxu0 %v998
    %v1000 = vpop.f32.mrf.mxu0
    %v1001 = vadd.f32 %v872, %v1000
    %v1002 = vpop.f32.mrf.mxu0
    %1003 = vdwg.mxu0
    %1004 = vmatprep.subr.mxu0 0.0
    %1005 = vmatpush1.msra.mxu0 0.0
    %1006 = vmatprep.subr.mxu0 0.0
    %1007 = vmatpush1.msra.mxu0 0.0
    %1008 = vmatprep.subr.mxu0 0.0
    %1009 = vmatpush1.msra.mxu0 0.0
    %1010 = vmatprep.subr.mxu0 0.0
    %1011 = vmatpush1.msra.mxu0 0.0
    %1012 = vmatprep.subr.mxu0 0.0
    %1013 = vmatpush1.msra.mxu0 0.0
    %1014 = vmatprep.subr.mxu0 0.0
    %1015 = vmatpush1.msra.mxu0 0.0
    %1016 = vmatprep.subr.mxu0 0.0
    %1017 = vmatpush1.msra.mxu0 0.0
    %1018 = vmatprep.subr.mxu0 0.0
    %1019 = vmatpush1.msra.mxu0 0.0
    %1020 = vmatprep.subr.mxu0 0.0
    %v1021 = vand.u32 %v761, 4294901760
    %v1022 = vsub.f32 %v761, %v1021
    %1023 = vmatpush1.msra.mxu0 %v1022
    %1024 = vmatprep.subr.mxu0 0.0
    %v1025 = vand.u32 %v760, 4294901760
    %v1026 = vsub.f32 %v760, %v1025
    %1027 = vmatpush1.msra.mxu0 %v1026
    %1028 = vmatprep.subr.mxu0 0.0
    %v1029 = vand.u32 %v759, 4294901760
    %v1030 = vsub.f32 %v759, %v1029
    %1031 = vmatpush1.msra.mxu0 %v1030
    %1032 = vmatprep.subr.mxu0 0.0
    %v1033 = vand.u32 %v758, 4294901760
    %v1034 = vsub.f32 %v758, %v1033
    %1035 = vmatpush1.msra.mxu0 %v1034
    %1036 = vmatprep.subr.mxu0 0.0
    %v1037 = vand.u32 %v757, 4294901760
    %v1038 = vsub.f32 %v757, %v1037
    %1039 = vmatpush1.msra.mxu0 %v1038
    %1040 = vmatprep.subr.mxu0 0.0
    %v1041 = vand.u32 %v756, 4294901760
    %v1042 = vsub.f32 %v756, %v1041
    %1043 = vmatpush1.msra.mxu0 %v1042
    %1044 = vmatprep.subr.mxu0 0.0
    %v1045 = vand.u32 %v755, 4294901760
    %v1046 = vsub.f32 %v755, %v1045
    %1047 = vmatpush1.msra.mxu0 %v1046
    %1048 = vmatprep.subr.mxu0 0.0
    %v1049 = vand.u32 %v754, 4294901760
    %v1050 = vsub.f32 %v754, %v1049
    %1051 = vmatpush1.msra.mxu0 %v1050
    %1052 = vmatprep.subr.mxu0 0.0
    %1053 = vmatpush2.msra.mxu0 0.0
    %1054 = vmatprep.subr.mxu0 0.0
    %1055 = vmatpush2.msra.mxu0 0.0
    %1056 = vmatprep.subr.mxu0 0.0
    %1057 = vmatpush2.msra.mxu0 0.0
    %1058 = vmatprep.subr.mxu0 0.0
    %1059 = vmatpush2.msra.mxu0 0.0
    %1060 = vmatprep.subr.mxu0 0.0
    %1061 = vmatpush2.msra.mxu0 0.0
    %1062 = vmatprep.subr.mxu0 0.0
    %1063 = vmatpush2.msra.mxu0 0.0
    %1064 = vmatprep.subr.mxu0 0.0
    %1065 = vmatpush2.msra.mxu0 0.0
    %1066 = vmatprep.subr.mxu0 0.0
    %1067 = vmatpush2.msra.mxu0 0.0
    %1068 = vmatprep.subr.mxu0 0.0
    %1069 = vmatpush2.msra.mxu0 0.0
    %1070 = vmatprep.subr.mxu0 0.0
    %1071 = vmatpush2.msra.mxu0 0.0
    %1072 = vmatprep.subr.mxu0 0.0
    %1073 = vmatpush2.msra.mxu0 0.0
    %1074 = vmatprep.subr.mxu0 0.0
    %1075 = vmatpush2.msra.mxu0 0.0
    %1076 = vmatprep.subr.mxu0 0.0
    %1077 = vmatpush2.msra.mxu0 0.0
    %1078 = vmatprep.subr.mxu0 0.0
    %1079 = vmatpush2.msra.mxu0 0.0
    %1080 = vmatprep.subr.mxu0 0.0
    %1081 = vmatpush2.msra.mxu0 0.0
    %1082 = vmatprep.subr.mxu0 0.0
    %1083 = vmatpush2.msra.mxu0 0.0
    %1084 = vmatprep.mubr.f32.mxu0 0.0
    %v1085 = vand.u32 %v76, 4294901760
    %v1086 = vsub.f32 %v76, %v1085
    %1087 = vmatmul.mubr.f32.gmra.mxu0 %v1086
    %v1088 = vpop.f32.mrf.mxu0
    %v1089 = vadd.f32 %v983, %v1088
    %v1090 = vpop.f32.mrf.mxu0
    %1091 = vmatprep.mubr.f32.mxu0 0.0
    %v1092 = vand.u32 %v79, 4294901760
    %v1093 = vsub.f32 %v79, %v1092
    %1094 = vmatmul.mubr.f32.gmra.mxu0 %v1093
    %v1095 = vpop.f32.mrf.mxu0
    %v1096 = vadd.f32 %v989, %v1095
    %v1097 = vpop.f32.mrf.mxu0
    %1098 = vmatprep.mubr.f32.mxu0 0.0
    %v1099 = vand.u32 %v82, 4294901760
    %v1100 = vsub.f32 %v82, %v1099
    %1101 = vmatmul.mubr.f32.gmra.mxu0 %v1100
    %v1102 = vpop.f32.mrf.mxu0
    %v1103 = vadd.f32 %v995, %v1102
    %v1104 = vpop.f32.mrf.mxu0
    %1105 = vmatprep.mubr.f32.mxu0 0.0
    %v1106 = vand.u32 %v85, 4294901760
    %v1107 = vsub.f32 %v85, %v1106
    %1108 = vmatmul.mubr.f32.gmra.mxu0 %v1107
    %v1109 = vpop.f32.mrf.mxu0
    %v1110 = vadd.f32 %v1001, %v1109
    %v1111 = vpop.f32.mrf.mxu0
    %1112 = vdwg.mxu0
    %1113 = vmatprep.subr.mxu0 0.0
    %1114 = vmatpush1.msra.mxu0 0.0
    %1115 = vmatprep.subr.mxu0 0.0
    %1116 = vmatpush1.msra.mxu0 0.0
    %1117 = vmatprep.subr.mxu0 0.0
    %1118 = vmatpush1.msra.mxu0 0.0
    %1119 = vmatprep.subr.mxu0 0.0
    %1120 = vmatpush1.msra.mxu0 0.0
    %1121 = vmatprep.subr.mxu0 0.0
    %1122 = vmatpush1.msra.mxu0 0.0
    %1123 = vmatprep.subr.mxu0 0.0
    %1124 = vmatpush1.msra.mxu0 0.0
    %1125 = vmatprep.subr.mxu0 0.0
    %1126 = vmatpush1.msra.mxu0 0.0
    %1127 = vmatprep.subr.mxu0 0.0
    %1128 = vmatpush1.msra.mxu0 0.0
    %1129 = vmatprep.subr.mxu0 0.0
    %v1130 = vand.u32 %v761, 4294901760
    %1131 = vmatpush1.msra.mxu0 %v1130
    %1132 = vmatprep.subr.mxu0 0.0
    %v1133 = vand.u32 %v760, 4294901760
    %1134 = vmatpush1.msra.mxu0 %v1133
    %1135 = vmatprep.subr.mxu0 0.0
    %v1136 = vand.u32 %v759, 4294901760
    %1137 = vmatpush1.msra.mxu0 %v1136
    %1138 = vmatprep.subr.mxu0 0.0
    %v1139 = vand.u32 %v758, 4294901760
    %1140 = vmatpush1.msra.mxu0 %v1139
    %1141 = vmatprep.subr.mxu0 0.0
    %v1142 = vand.u32 %v757, 4294901760
    %1143 = vmatpush1.msra.mxu0 %v1142
    %1144 = vmatprep.subr.mxu0 0.0
    %v1145 = vand.u32 %v756, 4294901760
    %1146 = vmatpush1.msra.mxu0 %v1145
    %1147 = vmatprep.subr.mxu0 0.0
    %v1148 = vand.u32 %v755, 4294901760
    %1149 = vmatpush1.msra.mxu0 %v1148
    %1150 = vmatprep.subr.mxu0 0.0
    %v1151 = vand.u32 %v754, 4294901760
    %1152 = vmatpush1.msra.mxu0 %v1151
    %1153 = vmatprep.subr.mxu0 0.0
    %1154 = vmatpush2.msra.mxu0 0.0
    %1155 = vmatprep.subr.mxu0 0.0
    %1156 = vmatpush2.msra.mxu0 0.0
    %1157 = vmatprep.subr.mxu0 0.0
    %1158 = vmatpush2.msra.mxu0 0.0
    %1159 = vmatprep.subr.mxu0 0.0
    %1160 = vmatpush2.msra.mxu0 0.0
    %1161 = vmatprep.subr.mxu0 0.0
    %1162 = vmatpush2.msra.mxu0 0.0
    %1163 = vmatprep.subr.mxu0 0.0
    %1164 = vmatpush2.msra.mxu0 0.0
    %1165 = vmatprep.subr.mxu0 0.0
    %1166 = vmatpush2.msra.mxu0 0.0
    %1167 = vmatprep.subr.mxu0 0.0
    %1168 = vmatpush2.msra.mxu0 0.0
    %1169 = vmatprep.subr.mxu0 0.0
    %1170 = vmatpush2.msra.mxu0 0.0
    %1171 = vmatprep.subr.mxu0 0.0
    %1172 = vmatpush2.msra.mxu0 0.0
    %1173 = vmatprep.subr.mxu0 0.0
    %1174 = vmatpush2.msra.mxu0 0.0
    %1175 = vmatprep.subr.mxu0 0.0
    %1176 = vmatpush2.msra.mxu0 0.0
    %1177 = vmatprep.subr.mxu0 0.0
    %1178 = vmatpush2.msra.mxu0 0.0
    %1179 = vmatprep.subr.mxu0 0.0
    %1180 = vmatpush2.msra.mxu0 0.0
    %1181 = vmatprep.subr.mxu0 0.0
    %1182 = vmatpush2.msra.mxu0 0.0
    %1183 = vmatprep.subr.mxu0 0.0
    %1184 = vmatpush2.msra.mxu0 0.0
    %1185 = vmatprep.mubr.f32.mxu0 0.0
    %v1186 = vand.u32 %v76, 4294901760
    %v1187 = vsub.f32 %v76, %v1186
    %v1188 = vand.u32 %v1187, 4294901760
    %1189 = vmatmul.mubr.f32.gmra.mxu0 %v1188
    %v1190 = vpop.f32.mrf.mxu0
    %v1191 = vadd.f32 %v1089, %v1190
    %v1192 = vpop.f32.mrf.mxu0
    %1193 = vmatprep.mubr.f32.mxu0 0.0
    %v1194 = vand.u32 %v79, 4294901760
    %v1195 = vsub.f32 %v79, %v1194
    %v1196 = vand.u32 %v1195, 4294901760
    %1197 = vmatmul.mubr.f32.gmra.mxu0 %v1196
    %v1198 = vpop.f32.mrf.mxu0
    %v1199 = vadd.f32 %v1096, %v1198
    %v1200 = vpop.f32.mrf.mxu0
    %1201 = vmatprep.mubr.f32.mxu0 0.0
    %v1202 = vand.u32 %v82, 4294901760
    %v1203 = vsub.f32 %v82, %v1202
    %v1204 = vand.u32 %v1203, 4294901760
    %1205 = vmatmul.mubr.f32.gmra.mxu0 %v1204
    %v1206 = vpop.f32.mrf.mxu0
    %v1207 = vadd.f32 %v1103, %v1206
    %v1208 = vpop.f32.mrf.mxu0
    %1209 = vmatprep.mubr.f32.mxu0 0.0
    %v1210 = vand.u32 %v85, 4294901760
    %v1211 = vsub.f32 %v85, %v1210
    %v1212 = vand.u32 %v1211, 4294901760
    %1213 = vmatmul.mubr.f32.gmra.mxu0 %v1212
    %v1214 = vpop.f32.mrf.mxu0
    %v1215 = vadd.f32 %v1110, %v1214
    %v1216 = vpop.f32.mrf.mxu0
    %1217 = vdwg.mxu0
    %1218 = vmatprep.subr.mxu0 0.0
    %1219 = vmatpush1.msra.mxu0 0.0
    %1220 = vmatprep.subr.mxu0 0.0
    %1221 = vmatpush1.msra.mxu0 0.0
    %1222 = vmatprep.subr.mxu0 0.0
    %1223 = vmatpush1.msra.mxu0 0.0
    %1224 = vmatprep.subr.mxu0 0.0
    %1225 = vmatpush1.msra.mxu0 0.0
    %1226 = vmatprep.subr.mxu0 0.0
    %1227 = vmatpush1.msra.mxu0 0.0
    %1228 = vmatprep.subr.mxu0 0.0
    %1229 = vmatpush1.msra.mxu0 0.0
    %1230 = vmatprep.subr.mxu0 0.0
    %1231 = vmatpush1.msra.mxu0 0.0
    %1232 = vmatprep.subr.mxu0 0.0
    %1233 = vmatpush1.msra.mxu0 0.0
    %1234 = vmatprep.subr.mxu0 0.0
    %v1235 = vand.u32 %v761, 4294901760
    %v1236 = vsub.f32 %v761, %v1235
    %v1237 = vand.u32 %v1236, 4294901760
    %1238 = vmatpush1.msra.mxu0 %v1237
    %1239 = vmatprep.subr.mxu0 0.0
    %v1240 = vand.u32 %v760, 4294901760
    %v1241 = vsub.f32 %v760, %v1240
    %v1242 = vand.u32 %v1241, 4294901760
    %1243 = vmatpush1.msra.mxu0 %v1242
    %1244 = vmatprep.subr.mxu0 0.0
    %v1245 = vand.u32 %v759, 4294901760
    %v1246 = vsub.f32 %v759, %v1245
    %v1247 = vand.u32 %v1246, 4294901760
    %1248 = vmatpush1.msra.mxu0 %v1247
    %1249 = vmatprep.subr.mxu0 0.0
    %v1250 = vand.u32 %v758, 4294901760
    %v1251 = vsub.f32 %v758, %v1250
    %v1252 = vand.u32 %v1251, 4294901760
    %1253 = vmatpush1.msra.mxu0 %v1252
    %1254 = vmatprep.subr.mxu0 0.0
    %v1255 = vand.u32 %v757, 4294901760
    %v1256 = vsub.f32 %v757, %v1255
    %v1257 = vand.u32 %v1256, 4294901760
    %1258 = vmatpush1.msra.mxu0 %v1257
    %1259 = vmatprep.subr.mxu0 0.0
    %v1260 = vand.u32 %v756, 4294901760
    %v1261 = vsub.f32 %v756, %v1260
    %v1262 = vand.u32 %v1261, 4294901760
    %1263 = vmatpush1.msra.mxu0 %v1262
    %1264 = vmatprep.subr.mxu0 0.0
    %v1265 = vand.u32 %v755, 4294901760
    %v1266 = vsub.f32 %v755, %v1265
    %v1267 = vand.u32 %v1266, 4294901760
    %1268 = vmatpush1.msra.mxu0 %v1267
    %1269 = vmatprep.subr.mxu0 0.0
    %v1270 = vand.u32 %v754, 4294901760
    %v1271 = vsub.f32 %v754, %v1270
    %v1272 = vand.u32 %v1271, 4294901760
    %1273 = vmatpush1.msra.mxu0 %v1272
    %1274 = vmatprep.subr.mxu0 0.0
    %1275 = vmatpush2.msra.mxu0 0.0
    %1276 = vmatprep.subr.mxu0 0.0
    %1277 = vmatpush2.msra.mxu0 0.0
    %1278 = vmatprep.subr.mxu0 0.0
    %1279 = vmatpush2.msra.mxu0 0.0
    %1280 = vmatprep.subr.mxu0 0.0
    %1281 = vmatpush2.msra.mxu0 0.0
    %1282 = vmatprep.subr.mxu0 0.0
    %1283 = vmatpush2.msra.mxu0 0.0
    %1284 = vmatprep.subr.mxu0 0.0
    %1285 = vmatpush2.msra.mxu0 0.0
    %1286 = vmatprep.subr.mxu0 0.0
    %1287 = vmatpush2.msra.mxu0 0.0
    %1288 = vmatprep.subr.mxu0 0.0
    %1289 = vmatpush2.msra.mxu0 0.0
    %1290 = vmatprep.subr.mxu0 0.0
    %1291 = vmatpush2.msra.mxu0 0.0
    %1292 = vmatprep.subr.mxu0 0.0
    %1293 = vmatpush2.msra.mxu0 0.0
    %1294 = vmatprep.subr.mxu0 0.0
    %1295 = vmatpush2.msra.mxu0 0.0
    %1296 = vmatprep.subr.mxu0 0.0
    %1297 = vmatpush2.msra.mxu0 0.0
    %1298 = vmatprep.subr.mxu0 0.0
    %1299 = vmatpush2.msra.mxu0 0.0
    %1300 = vmatprep.subr.mxu0 0.0
    %1301 = vmatpush2.msra.mxu0 0.0
    %1302 = vmatprep.subr.mxu0 0.0
    %1303 = vmatpush2.msra.mxu0 0.0
    %1304 = vmatprep.subr.mxu0 0.0
    %1305 = vmatpush2.msra.mxu0 0.0
    %1306 = vmatprep.mubr.f32.mxu0 0.0
    %v1307 = vand.u32 %v76, 4294901760
    %1308 = vmatmul.mubr.f32.gmra.mxu0 %v1307
    %v1309 = vpop.f32.mrf.mxu0
    %v1310 = vadd.f32 %v1191, %v1309
    %v1311 = vpop.f32.mrf.mxu0
    %1312 = vmatprep.mubr.f32.mxu0 0.0
    %v1313 = vand.u32 %v79, 4294901760
    %1314 = vmatmul.mubr.f32.gmra.mxu0 %v1313
    %v1315 = vpop.f32.mrf.mxu0
    %v1316 = vadd.f32 %v1199, %v1315
    %v1317 = vpop.f32.mrf.mxu0
    %1318 = vmatprep.mubr.f32.mxu0 0.0
    %v1319 = vand.u32 %v82, 4294901760
    %1320 = vmatmul.mubr.f32.gmra.mxu0 %v1319
    %v1321 = vpop.f32.mrf.mxu0
    %v1322 = vadd.f32 %v1207, %v1321
    %v1323 = vpop.f32.mrf.mxu0
    %1324 = vmatprep.mubr.f32.mxu0 0.0
    %v1325 = vand.u32 %v85, 4294901760
    %1326 = vmatmul.mubr.f32.gmra.mxu0 %v1325
    %v1327 = vpop.f32.mrf.mxu0
    %v1328 = vadd.f32 %v1215, %v1327
    %v1329 = vpop.f32.mrf.mxu0
    %1330 = vdwg.mxu0
    %1331 = vmatprep.subr.mxu0 0.0
    %1332 = vmatpush1.msra.mxu0 0.0
    %1333 = vmatprep.subr.mxu0 0.0
    %1334 = vmatpush1.msra.mxu0 0.0
    %1335 = vmatprep.subr.mxu0 0.0
    %1336 = vmatpush1.msra.mxu0 0.0
    %1337 = vmatprep.subr.mxu0 0.0
    %1338 = vmatpush1.msra.mxu0 0.0
    %1339 = vmatprep.subr.mxu0 0.0
    %1340 = vmatpush1.msra.mxu0 0.0
    %1341 = vmatprep.subr.mxu0 0.0
    %1342 = vmatpush1.msra.mxu0 0.0
    %1343 = vmatprep.subr.mxu0 0.0
    %1344 = vmatpush1.msra.mxu0 0.0
    %1345 = vmatprep.subr.mxu0 0.0
    %1346 = vmatpush1.msra.mxu0 0.0
    %1347 = vmatprep.subr.mxu0 0.0
    %v1348 = vand.u32 %v761, 4294901760
    %1349 = vmatpush1.msra.mxu0 %v1348
    %1350 = vmatprep.subr.mxu0 0.0
    %v1351 = vand.u32 %v760, 4294901760
    %1352 = vmatpush1.msra.mxu0 %v1351
    %1353 = vmatprep.subr.mxu0 0.0
    %v1354 = vand.u32 %v759, 4294901760
    %1355 = vmatpush1.msra.mxu0 %v1354
    %1356 = vmatprep.subr.mxu0 0.0
    %v1357 = vand.u32 %v758, 4294901760
    %1358 = vmatpush1.msra.mxu0 %v1357
    %1359 = vmatprep.subr.mxu0 0.0
    %v1360 = vand.u32 %v757, 4294901760
    %1361 = vmatpush1.msra.mxu0 %v1360
    %1362 = vmatprep.subr.mxu0 0.0
    %v1363 = vand.u32 %v756, 4294901760
    %1364 = vmatpush1.msra.mxu0 %v1363
    %1365 = vmatprep.subr.mxu0 0.0
    %v1366 = vand.u32 %v755, 4294901760
    %1367 = vmatpush1.msra.mxu0 %v1366
    %1368 = vmatprep.subr.mxu0 0.0
    %v1369 = vand.u32 %v754, 4294901760
    %1370 = vmatpush1.msra.mxu0 %v1369
    %1371 = vmatprep.subr.mxu0 0.0
    %1372 = vmatpush2.msra.mxu0 0.0
    %1373 = vmatprep.subr.mxu0 0.0
    %1374 = vmatpush2.msra.mxu0 0.0
    %1375 = vmatprep.subr.mxu0 0.0
    %1376 = vmatpush2.msra.mxu0 0.0
    %1377 = vmatprep.subr.mxu0 0.0
    %1378 = vmatpush2.msra.mxu0 0.0
    %1379 = vmatprep.subr.mxu0 0.0
    %1380 = vmatpush2.msra.mxu0 0.0
    %1381 = vmatprep.subr.mxu0 0.0
    %1382 = vmatpush2.msra.mxu0 0.0
    %1383 = vmatprep.subr.mxu0 0.0
    %1384 = vmatpush2.msra.mxu0 0.0
    %1385 = vmatprep.subr.mxu0 0.0
    %1386 = vmatpush2.msra.mxu0 0.0
    %1387 = vmatprep.subr.mxu0 0.0
    %1388 = vmatpush2.msra.mxu0 0.0
    %1389 = vmatprep.subr.mxu0 0.0
    %1390 = vmatpush2.msra.mxu0 0.0
    %1391 = vmatprep.subr.mxu0 0.0
    %1392 = vmatpush2.msra.mxu0 0.0
    %1393 = vmatprep.subr.mxu0 0.0
    %1394 = vmatpush2.msra.mxu0 0.0
    %1395 = vmatprep.subr.mxu0 0.0
    %1396 = vmatpush2.msra.mxu0 0.0
    %1397 = vmatprep.subr.mxu0 0.0
    %1398 = vmatpush2.msra.mxu0 0.0
    %1399 = vmatprep.subr.mxu0 0.0
    %1400 = vmatpush2.msra.mxu0 0.0
    %1401 = vmatprep.subr.mxu0 0.0
    %1402 = vmatpush2.msra.mxu0 0.0
    %1403 = vmatprep.mubr.f32.mxu0 0.0
    %v1404 = vand.u32 %v76, 4294901760
    %1405 = vmatmul.mubr.f32.gmra.mxu0 %v1404
    %v1406 = vpop.f32.mrf.mxu0
    %v1407 = vadd.f32 %v1310, %v1406
    %v1408 = vpop.f32.mrf.mxu0
    %1409 = vmatprep.mubr.f32.mxu0 0.0
    %v1410 = vand.u32 %v79, 4294901760
    %1411 = vmatmul.mubr.f32.gmra.mxu0 %v1410
    %v1412 = vpop.f32.mrf.mxu0
    %v1413 = vadd.f32 %v1316, %v1412
    %v1414 = vpop.f32.mrf.mxu0
    %1415 = vmatprep.mubr.f32.mxu0 0.0
    %v1416 = vand.u32 %v82, 4294901760
    %1417 = vmatmul.mubr.f32.gmra.mxu0 %v1416
    %v1418 = vpop.f32.mrf.mxu0
    %v1419 = vadd.f32 %v1322, %v1418
    %v1420 = vpop.f32.mrf.mxu0
    %1421 = vmatprep.mubr.f32.mxu0 0.0
    %v1422 = vand.u32 %v85, 4294901760
    %1423 = vmatmul.mubr.f32.gmra.mxu0 %v1422
    %v1424 = vpop.f32.mrf.mxu0
    %v1425 = vadd.f32 %v1328, %v1424
    %v1426 = vpop.f32.mrf.mxu0
    %1427 = vdwg.mxu0
    %1428 = vxpose.xlu0.b32.start [1/16] %v732, 128
    %1429 = vxpose.xlu0.b32.cont [2/16] %v738, 128
    %1430 = vxpose.xlu0.b32.cont [3/16] %v744, 128
    %1431 = vxpose.xlu0.b32.cont [4/16] %v750, 128
    %1432 = vxpose.xlu0.b32.cont [5/16] %v1407, 128
    %1433 = vxpose.xlu0.b32.cont [6/16] %v1413, 128
    %1434 = vxpose.xlu0.b32.cont [7/16] %v1419, 128
    %1435 = vxpose.xlu0.b32.cont [8/16] %v1425, 128
    %1436 = vxpose.xlu0.b32.cont [9/16] 0.0, 128
    %1437 = vxpose.xlu0.b32.cont [10/16] 0.0, 128
    %1438 = vxpose.xlu0.b32.cont [11/16] 0.0, 128
    %1439 = vxpose.xlu0.b32.cont [12/16] 0.0, 128
    %1440 = vxpose.xlu0.b32.cont [13/16] 0.0, 128
    %1441 = vxpose.xlu0.b32.cont [14/16] 0.0, 128
    %1442 = vxpose.xlu0.b32.cont [15/16] 0.0, 128
    %1443 = vxpose.xlu0.b32.end [16/16] 0.0, 128
    %v1444 = vpop.trf.xlu0
    %v1445 = vpop.trf.xlu0
    %v1446 = vpop.trf.xlu0
    %v1447 = vpop.trf.xlu0
    %v1448 = vpop.trf.xlu0
    %v1449 = vpop.trf.xlu0
    %v1450 = vpop.trf.xlu0
    %v1451 = vpop.trf.xlu0
    %v1452 = vpop.trf.xlu0
    %v1453 = vpop.trf.xlu0
    %v1454 = vpop.trf.xlu0
    %v1455 = vpop.trf.xlu0
    %v1456 = vpop.trf.xlu0
    %v1457 = vpop.trf.xlu0
    %v1458 = vpop.trf.xlu0
    %v1459 = vpop.trf.xlu0
    %v1460 = vld [vmem:[%s2] sm:$0x1]
    %v1462 = vlaneseq
    %v1463 = vshrl.u32 %v1462, 7
    %v1464 = vsub.s32 0, %v1463
    %v1465 = vrot.slane %v1460, %v1464
    %v1467 = vadd.f32 %v1444, %v1465
    %v1468 = vadd.f32 %v1445, %v1465
    %v1469 = vadd.f32 %v1446, %v1465
    %v1470 = vadd.f32 %v1447, %v1465
    %v1471 = vadd.f32 %v1448, %v1465
    %v1472 = vadd.f32 %v1449, %v1465
    %v1473 = vadd.f32 %v1450, %v1465
    %v1474 = vadd.f32 %v1451, %v1465
    %1475 = vst.msk [vmem:[#allocation8] sm:$0xff] %vm74, %v1467
    %1476 = vst.msk [vmem:[#allocation8 + $0x8] sm:$0xff] %vm74, %v1468
    %1477 = vst.msk [vmem:[#allocation8 + $0x10] sm:$0xff] %vm74, %v1469
    %1478 = vst.msk [vmem:[#allocation8 + $0x18] sm:$0xff] %vm74, %v1470
    %1479 = vst.msk [vmem:[#allocation8 + $0x20] sm:$0xff] %vm74, %v1471
    %1480 = vst.msk [vmem:[#allocation8 + $0x28] sm:$0xff] %vm74, %v1472
    %1481 = vst.msk [vmem:[#allocation8 + $0x30] sm:$0xff] %vm74, %v1473
    %1482 = vst.msk [vmem:[#allocation8 + $0x38] sm:$0xff] %vm74, %v1474
    %v1483 = vld [vmem:[#allocation7] sm:$0xff]
    %v1484 = vld [vmem:[#allocation7 + $0x8] sm:$0xff]
    %v1485 = vld [vmem:[#allocation7 + $0x10] sm:$0xff]
    %v1486 = vld [vmem:[#allocation7 + $0x18] sm:$0xff]
    %s1487 = scalar_lea.vmem [#allocation7], 32
    %v1488 = vld [vmem:[%s1487] sm:$0xff]
    %v1489 = vld [vmem:[%s1487 + $0x8] sm:$0xff]
    %v1490 = vld [vmem:[%s1487 + $0x10] sm:$0xff]
    %v1491 = vld [vmem:[%s1487 + $0x18] sm:$0xff]
    %1492 = vxpose.xlu0.b32.start [1/16] %v1483, 128
    %1493 = vxpose.xlu0.b32.cont [2/16] %v1484, 128
    %1494 = vxpose.xlu0.b32.cont [3/16] %v1485, 128
    %1495 = vxpose.xlu0.b32.cont [4/16] %v1486, 128
    %1496 = vxpose.xlu0.b32.cont [5/16] %v1488, 128
    %1497 = vxpose.xlu0.b32.cont [6/16] %v1489, 128
    %1498 = vxpose.xlu0.b32.cont [7/16] %v1490, 128
    %1499 = vxpose.xlu0.b32.cont [8/16] %v1491, 128
    %1500 = vxpose.xlu0.b32.cont [9/16] 0.0, 128
    %1501 = vxpose.xlu0.b32.cont [10/16] 0.0, 128
    %1502 = vxpose.xlu0.b32.cont [11/16] 0.0, 128
    %1503 = vxpose.xlu0.b32.cont [12/16] 0.0, 128
    %1504 = vxpose.xlu0.b32.cont [13/16] 0.0, 128
    %1505 = vxpose.xlu0.b32.cont [14/16] 0.0, 128
    %1506 = vxpose.xlu0.b32.cont [15/16] 0.0, 128
    %1507 = vxpose.xlu0.b32.end [16/16] 0.0, 128
    %v1508 = vpop.trf.xlu0
    %v1509 = vpop.trf.xlu0
    %v1510 = vpop.trf.xlu0
    %v1511 = vpop.trf.xlu0
    %v1512 = vpop.trf.xlu0
    %v1513 = vpop.trf.xlu0
    %v1514 = vpop.trf.xlu0
    %v1515 = vpop.trf.xlu0
    %v1516 = vpop.trf.xlu0
    %v1517 = vpop.trf.xlu0
    %v1518 = vpop.trf.xlu0
    %v1519 = vpop.trf.xlu0
    %v1520 = vpop.trf.xlu0
    %v1521 = vpop.trf.xlu0
    %v1522 = vpop.trf.xlu0
    %v1523 = vpop.trf.xlu0
    %1524 = vst.msk [vmem:[#allocation9] sm:$0xff] %vm74, %v1508
    %1525 = vst.msk [vmem:[#allocation9 + $0x8] sm:$0xff] %vm74, %v1509
    %1526 = vst.msk [vmem:[#allocation9 + $0x10] sm:$0xff] %vm74, %v1510
    %1527 = vst.msk [vmem:[#allocation9 + $0x18] sm:$0xff] %vm74, %v1511
    %1528 = vst.msk [vmem:[#allocation9 + $0x20] sm:$0xff] %vm74, %v1512
    %1529 = vst.msk [vmem:[#allocation9 + $0x28] sm:$0xff] %vm74, %v1513
    %1530 = vst.msk [vmem:[#allocation9 + $0x30] sm:$0xff] %vm74, %v1514
    %1531 = vst.msk [vmem:[#allocation9 + $0x38] sm:$0xff] %vm74, %v1515
    // Predicated region
    $region30: #{tpu_custom_call.1} parent=1 // pred_check
      _
    $region31: #{tpu_custom_call.1} parent=1 // pred_check_branch
      %1533 = sbr.rel (0) target = $region33
    $region32: #{tpu_custom_call.1} parent=1 // pred_region
      %s1535 = ssub.s32 1024, 1024
      %1536 = vsyncadd [#allocation4], %s1535
      %s1537 = sshll.u32 [#allocation8], 4
      %s1538 = int_to_ptr.vmem [resolvable:$true] %s1537
      %1543 = dma.vmem_to_hbm [thread:$0]  %s1538, 1024, %s4, [#allocation4], 128, 128, 8
    $region33: #{tpu_custom_call.1} parent=1 // pred_fallthru
      _
    // Predicated region
    $region34: #{tpu_custom_call.1} parent=1 // pred_check
      _
    $region35: #{tpu_custom_call.1} parent=1 // pred_check_branch
      %1545 = sbr.rel (0) target = $region37
    $region36: #{tpu_custom_call.1} parent=1 // pred_region
      %s1547 = ssub.s32 1024, 1024
      %1548 = vsyncadd [#allocation10], %s1547
      %s1549 = sshll.u32 [#allocation9], 4
      %s1550 = int_to_ptr.vmem [resolvable:$true] %s1549
      %1555 = dma.vmem_to_hbm [thread:$0]  %s1550, 1024, %s5, [#allocation10], 128, 128, 8
    $region37: #{tpu_custom_call.1} parent=1 // pred_fallthru
      _
    // Predicated region
    $region38: #{tpu_custom_call.1} parent=1 // pred_check
      _
    $region39: #{tpu_custom_call.1} parent=1 // pred_check_branch
      %1557 = sbr.rel (0) target = $region41
    $region40: #{tpu_custom_call.1} parent=1 // pred_region
      %1558 = dma.done [#allocation4], 1024
    $region41: #{tpu_custom_call.1} parent=1 // pred_fallthru
      _
    // Predicated region
    $region42: #{tpu_custom_call.1} parent=1 // pred_check
      _
    $region43: #{tpu_custom_call.1} parent=1 // pred_check_branch
      %1560 = sbr.rel (0) target = $region45
    $region44: #{tpu_custom_call.1} parent=1 // pred_region
      %1561 = dma.done [#allocation10], 1024
    $region45: #{tpu_custom_call.1} parent=1 // pred_fallthru
      _
    %1562 = vsyncpa [#allocation3], 1
    %1563 = vsyncpa [#allocation6], 1
    %1564 = vsyncpa [#allocation4], 1
    %1565 = vsyncpa [#allocation10], 1

</llo_original>
